<compile_context>
chip_gen: v7x
topology: tpu7x:2x2x1
jax: 0.10.0
libtpu: 0.0.40
codegen_flags: <defaults>
</compile_context>

<pallas_src>
import functools

import numpy as np
import jax
import jax.numpy as jnp
from jax import lax
from jax.experimental import pallas as pl
from jax.experimental.pallas import tpu as pltpu

BN_EPS = 1e-5
_CDT = jnp.bfloat16  # MXU operand dtype


# ------------------------------ Pallas kernel --------------------------------
def _bottleneck_kernel(stride, Wo, Mo, downsample, *refs):
    """Fused ResNet bottleneck for one image, channel-major (C, Ho*Wo)."""
    if downsample:
        (xph_ref, masks_ref, w1_ref, w2_ref, w3_ref, wd_ref,
         b1_ref, b2_ref, b3_ref, bd_ref, o_ref) = refs
    else:
        (xph_ref, masks_ref, w1_ref, w2_ref, w3_ref,
         b1_ref, b2_ref, b3_ref, o_ref) = refs
        wd_ref = bd_ref = None

    s = stride
    f32 = jnp.float32

    # conv1 (1x1) + bn1 + relu: one matmul per spatial phase of x.
    y1 = []
    for p in range(s * s):
        xp = xph_ref[0, p]                                        # (Cin, Mo) bf16
        v = jnp.dot(w1_ref[...], xp, preferred_element_type=f32)
        y1.append(jnp.maximum(v + b1_ref[...], 0.0))              # (Cmid, Mo) f32

    # conv2 (3x3, stride s, pad 1) + bn2 + relu: 9 shifted matmul-accumulates.
    acc = jnp.zeros_like(y1[0])
    for dy in range(3):
        oy, pr = divmod(dy - 1, s)           # row shift / row phase
        for dx in range(3):
            ox, pc = divmod(dx - 1, s)       # col shift / col phase
            t = dy * 3 + dx
            a = y1[pr * s + pc]
            k = oy * Wo + ox                 # flattened lane shift
            if k != 0:
                a = pltpu.roll(a, (-k) % Mo, axis=1)
            if oy != 0 or ox != 0:
                a = a * masks_ref[t:t + 1, :]   # zero taps that hit the padding
            acc = acc + jnp.dot(w2_ref[t], a.astype(_CDT),
                                preferred_element_type=f32)
    y2 = jnp.maximum(acc + b2_ref[...], 0.0)                      # (Cmid, Mo) f32

    # residual branch: phase (0, 0) of x is exactly x[:, ::s, ::s].
    if downsample:
        res = jnp.dot(wd_ref[...], xph_ref[0, 0],
                      preferred_element_type=f32) + bd_ref[...]
    else:
        res = xph_ref[0, 0].astype(f32)                           # identity

    # conv3 (1x1) + bn3 + residual add + relu.
    y3 = jnp.dot(w3_ref[...], y2.astype(_CDT),
                 preferred_element_type=f32) + b3_ref[...] + res
    o_ref[0] = jnp.maximum(y3, 0.0).astype(o_ref.dtype)


# ------------------------------ JAX wrapper -----------------------------------
def fold_bn(gamma, beta, mean, var):
    scale = gamma / jnp.sqrt(var + BN_EPS)
    shift = beta - mean * scale
    return scale, shift


@functools.partial(jax.jit, static_argnums=(2, 3))
def bottleneck_forward(x_nchw, p, stride, downsample):
    N, Cin, H, W = x_nchw.shape
    Cmid = p["w1"].shape[0]
    Cexp = 4 * Cmid
    s = stride
    if not downsample:
        assert s == 1 and Cin == Cexp, (
            "identity shortcut requires stride == 1 and in_channels == 4*out_channels")
    assert H % s == 0 and W % s == 0
    Ho, Wo = H // s, W // s
    Mo, P = Ho * Wo, s * s

    # Spatial phase split of x (pure reshape for stride 1): provides conv2's
    # stride phases and the residual (phase 0 == x[:, ::s, ::s]) in one pass.
    if s == 1:
        xph = x_nchw.reshape(N, 1, Cin, Mo)
    else:
        xph = jnp.concatenate(
            [x_nchw[:, :, pr::s, pc::s].reshape(N, 1, Cin, Mo)
             for pr in range(s) for pc in range(s)], axis=1)
    xph = xph.astype(_CDT)

    # 3x3-tap validity masks (zero where a tap falls into conv2's zero padding).
    rows = jnp.arange(Ho, dtype=jnp.int32)[:, None]
    cols = jnp.arange(Wo, dtype=jnp.int32)[None, :]
    masks = []
    for dy in range(3):
        oy = (dy - 1) // s
        for dx in range(3):
            ox = (dx - 1) // s
            valid = ((rows + oy >= 0) & (rows + oy < Ho) &
                     (cols + ox >= 0) & (cols + ox < Wo))
            masks.append(valid.reshape(1, Mo))
    masks = jnp.concatenate(masks, axis=0).astype(jnp.float32)        # (9, Mo)

    # Fold BN scales into conv weights (bf16 MXU operands); shifts stay f32.
    s1, b1 = fold_bn(p["bn1_g"], p["bn1_b"], p["bn1_m"], p["bn1_v"])
    s2, b2 = fold_bn(p["bn2_g"], p["bn2_b"], p["bn2_m"], p["bn2_v"])
    s3, b3 = fold_bn(p["bn3_g"], p["bn3_b"], p["bn3_m"], p["bn3_v"])
    w1s = (p["w1"][:, :, 0, 0] * s1[:, None]).astype(_CDT)            # (Cmid, Cin)
    w2s = jnp.transpose(p["w2"] * s2[:, None, None, None],
                        (2, 3, 0, 1)).reshape(9, Cmid, Cmid).astype(_CDT)
    w3s = (p["w3"][:, :, 0, 0] * s3[:, None]).astype(_CDT)            # (Cexp, Cmid)

    def full_spec(a):
        return pl.BlockSpec(a.shape, lambda i: (0,) * a.ndim)

    args = [xph, masks, w1s, w2s, w3s]
    in_specs = [pl.BlockSpec((1, P, Cin, Mo), lambda i: (i, 0, 0, 0)),
                full_spec(masks), full_spec(w1s), full_spec(w2s), full_spec(w3s)]
    shifts = [b1.reshape(Cmid, 1), b2.reshape(Cmid, 1), b3.reshape(Cexp, 1)]
    if downsample:
        sd, bd = fold_bn(p["bnd_g"], p["bnd_b"], p["bnd_m"], p["bnd_v"])
        wds = (p["wd"][:, :, 0, 0] * sd[:, None]).astype(_CDT)        # (Cexp, Cin)
        args.append(wds)
        in_specs.append(full_spec(wds))
        shifts.append(bd.reshape(Cexp, 1))
    for sh in shifts:
        sh = sh.astype(jnp.float32)
        args.append(sh)
        in_specs.append(full_spec(sh))

    kernel = functools.partial(_bottleneck_kernel, s, Wo, Mo, downsample)
    out = pl.pallas_call(
        kernel,
        out_shape=jax.ShapeDtypeStruct((N, Cexp, Mo), jnp.float32),
        grid=(N,),
        in_specs=in_specs,
        out_specs=pl.BlockSpec((1, Cexp, Mo), lambda i: (i, 0, 0)),
        compiler_params=pltpu.CompilerParams(
            dimension_semantics=("parallel",),
            vmem_limit_bytes=32 * 1024 * 1024),
    )(*args)
    return out.reshape(N, Cexp, Ho, Wo)


# -------------------------- parameters & reference ---------------------------
def init_params(key, in_channels, out_channels, downsample):
    exp = 4 * out_channels
    keys = jax.random.split(key, 8)

    def bn_init(k, c):
        k1, k2, k3, k4 = jax.random.split(k, 4)
        return dict(
            g=jax.random.uniform(k1, (c,), jnp.float32, 0.5, 1.5),
            b=0.1 * jax.random.normal(k2, (c,), jnp.float32),
            m=0.1 * jax.random.normal(k3, (c,), jnp.float32),
            v=jax.random.uniform(k4, (c,), jnp.float32, 0.5, 1.5),
        )

    p = {}
    p["w1"] = 0.2 * jax.random.normal(keys[0], (out_channels, in_channels, 1, 1), jnp.float32)
    p["w2"] = 0.2 * jax.random.normal(keys[1], (out_channels, out_channels, 3, 3), jnp.float32)
    p["w3"] = 0.2 * jax.random.normal(keys[2], (exp, out_channels, 1, 1), jnp.float32)
    for name, k, c in (("bn1", keys[3], out_channels),
                       ("bn2", keys[4], out_channels),
                       ("bn3", keys[5], exp)):
        bn = bn_init(k, c)
        for f in "gbmv":
            p[f"{name}_{f}"] = bn[f]
    if downsample:
        p["wd"] = 0.2 * jax.random.normal(keys[6], (exp, in_channels, 1, 1), jnp.float32)
        bn = bn_init(keys[7], exp)
        for f in "gbmv":
            p[f"bnd_{f}"] = bn[f]
    return p


def ref_forward(x, p, stride, downsample):
    """Pure-JAX reference (NCHW, lax.conv) mirroring the PyTorch forward."""
    def bn(y, pre):
        g, b, m, v = p[pre + "_g"], p[pre + "_b"], p[pre + "_m"], p[pre + "_v"]
        inv = g / jnp.sqrt(v + BN_EPS)
        return y * inv[None, :, None, None] + (b - m * inv)[None, :, None, None]

    dn = ("NCHW", "OIHW", "NCHW")
    hp = lax.Precision.HIGHEST
    y = lax.conv_general_dilated(x, p["w1"], (1, 1), "VALID",
                                 dimension_numbers=dn, precision=hp)
    y = jax.nn.relu(bn(y, "bn1"))
    y = lax.conv_general_dilated(y, p["w2"], (stride, stride), ((1, 1), (1, 1)),
                                 dimension_numbers=dn, precision=hp)
    y = jax.nn.relu(bn(y, "bn2"))
    y = lax.conv_general_dilated(y, p["w3"], (1, 1), "VALID",
                                 dimension_numbers=dn, precision=hp)
    y = bn(y, "bn3")
    if downsample:
        i = lax.conv_general_dilated(x, p["wd"], (stride, stride), "VALID",
                                     dimension_numbers=dn, precision=hp)
        i = bn(i, "bnd")
    else:
        i = x
    return jax.nn.relu(y + i)


# ---------------------------------- main --------------------------------------
if __name__ == "__main__":
    key = jax.random.PRNGKey(0)
    kx, kp1, kp2 = jax.random.split(key, 3)

    # Config A: stride-2 bottleneck with downsample projection.
    in_c, out_c, stride = 8, 8, 2
    x = jax.random.normal(kx, (2, in_c, 32, 32), jnp.float32)
    p = init_params(kp1, in_c, out_c, downsample=True)
    y = jax.block_until_ready(bottleneck_forward(x, p, stride, True))
    y_ref = ref_forward(x, p, stride, True)
    np.testing.assert_allclose(np.asarray(y), np.asarray(y_ref),
                               rtol=5e-2, atol=5e-2)

    # Config B: identity shortcut (Cin == 4*Cout, stride 1, no downsample).
    in_c2, out_c2 = 32, 8
    x2 = jax.random.normal(kx, (2, in_c2, 16, 16), jnp.float32)
    p2 = init_params(kp2, in_c2, out_c2, downsample=False)
    y2 = jax.block_until_ready(bottleneck_forward(x2, p2, 1, False))
    y2_ref = ref_forward(x2, p2, 1, False)
    np.testing.assert_allclose(np.asarray(y2), np.asarray(y2_ref),
                               rtol=5e-2, atol=5e-2)

    print("KERNEL_OK")
</pallas_src>

<mosaic_0001>
module attributes {stable_mosaic.version = 11 : i64} {
  func.func @_bottleneck_kernel(%arg0: i32, %arg1: memref<1x4x8x256xbf16, #tpu.memory_space<vmem>>, %arg2: memref<9x256xf32, #tpu.memory_space<vmem>>, %arg3: memref<8x8xbf16, #tpu.memory_space<vmem>>, %arg4: memref<9x8x8xbf16, #tpu.memory_space<vmem>>, %arg5: memref<32x8xbf16, #tpu.memory_space<vmem>>, %arg6: memref<32x8xbf16, #tpu.memory_space<vmem>>, %arg7: memref<8x1xf32, #tpu.memory_space<vmem>>, %arg8: memref<8x1xf32, #tpu.memory_space<vmem>>, %arg9: memref<32x1xf32, #tpu.memory_space<vmem>>, %arg10: memref<32x1xf32, #tpu.memory_space<vmem>>, %arg11: memref<1x32x256xf32, #tpu.memory_space<vmem>>) attributes {dimension_semantics = [#tpu.dimension_semantics<parallel>], iteration_bounds = array<i64: 2>, scalar_prefetch = 0 : i64, scratch_operands = 0 : i64, tpu.core_type = #tpu.core_type<tc>, window_params = [{transform_indices = @transform_0, window_bounds = array<i64: 1, 4, 8, 256>}, {pipeline_mode = #tpu.pipeline_mode<synchronous>, transform_indices = @transform_1, window_bounds = array<i64: 9, 256>}, {pipeline_mode = #tpu.pipeline_mode<synchronous>, transform_indices = @transform_2, window_bounds = array<i64: 8, 8>}, {pipeline_mode = #tpu.pipeline_mode<synchronous>, transform_indices = @transform_3, window_bounds = array<i64: 9, 8, 8>}, {pipeline_mode = #tpu.pipeline_mode<synchronous>, transform_indices = @transform_4, window_bounds = array<i64: 32, 8>}, {pipeline_mode = #tpu.pipeline_mode<synchronous>, transform_indices = @transform_5, window_bounds = array<i64: 32, 8>}, {pipeline_mode = #tpu.pipeline_mode<synchronous>, transform_indices = @transform_6, window_bounds = array<i64: 8, 1>}, {pipeline_mode = #tpu.pipeline_mode<synchronous>, transform_indices = @transform_7, window_bounds = array<i64: 8, 1>}, {pipeline_mode = #tpu.pipeline_mode<synchronous>, transform_indices = @transform_8, window_bounds = array<i64: 32, 1>}, {pipeline_mode = #tpu.pipeline_mode<synchronous>, transform_indices = @transform_9, window_bounds = array<i64: 32, 1>}, {transform_indices = @transform_10, window_bounds = array<i64: 1, 32, 256>}]} {
    %c0 = arith.constant 0 : index
    %c0_0 = arith.constant 0 : index
    %c0_1 = arith.constant 0 : index
    %c0_2 = arith.constant 0 : index
    %0 = vector.load %arg1[%c0, %c0_0, %c0_1, %c0_2] : memref<1x4x8x256xbf16, #tpu.memory_space<vmem>>, vector<1x1x8x256xbf16>
    %1 = vector.shape_cast %0 : vector<1x1x8x256xbf16> to vector<8x256xbf16>
    %c0_3 = arith.constant 0 : index
    %c0_4 = arith.constant 0 : index
    %2 = vector.load %arg3[%c0_3, %c0_4] : memref<8x8xbf16, #tpu.memory_space<vmem>>, vector<8x8xbf16>
    %cst = arith.constant dense<0.000000e+00> : vector<8x256xf32>
    %3 = tpu.matmul %2, %1, %cst {dimension_numbers = #tpu.dot_dimension_numbers<[1], [0], [0], [1], [0, 0, 1, 1], [], []>} : vector<8x8xbf16>, vector<8x256xbf16>, vector<8x256xf32> -> vector<8x256xf32>
    %c0_5 = arith.constant 0 : index
    %c0_6 = arith.constant 0 : index
    %4 = vector.load %arg7[%c0_5, %c0_6] : memref<8x1xf32, #tpu.memory_space<vmem>>, vector<8x1xf32>
    %5 = vector.broadcast %4 : vector<8x1xf32> to vector<8x256xf32>
    %6 = arith.addf %3, %5 : vector<8x256xf32>
    %cst_7 = arith.constant 0.000000e+00 : f32
    %7 = vector.broadcast %cst_7 : f32 to vector<8x256xf32>
    %8 = arith.maximumf %6, %7 : vector<8x256xf32>
    %c0_8 = arith.constant 0 : index
    %c1 = arith.constant 1 : index
    %c0_9 = arith.constant 0 : index
    %c0_10 = arith.constant 0 : index
    %9 = vector.load %arg1[%c0_8, %c1, %c0_9, %c0_10] : memref<1x4x8x256xbf16, #tpu.memory_space<vmem>>, vector<1x1x8x256xbf16>
    %10 = vector.shape_cast %9 : vector<1x1x8x256xbf16> to vector<8x256xbf16>
    %c0_11 = arith.constant 0 : index
    %c0_12 = arith.constant 0 : index
    %11 = vector.load %arg3[%c0_11, %c0_12] : memref<8x8xbf16, #tpu.memory_space<vmem>>, vector<8x8xbf16>
    %cst_13 = arith.constant dense<0.000000e+00> : vector<8x256xf32>
    %12 = tpu.matmul %11, %10, %cst_13 {dimension_numbers = #tpu.dot_dimension_numbers<[1], [0], [0], [1], [0, 0, 1, 1], [], []>} : vector<8x8xbf16>, vector<8x256xbf16>, vector<8x256xf32> -> vector<8x256xf32>
    %c0_14 = arith.constant 0 : index
    %c0_15 = arith.constant 0 : index
    %13 = vector.load %arg7[%c0_14, %c0_15] : memref<8x1xf32, #tpu.memory_space<vmem>>, vector<8x1xf32>
    %14 = vector.broadcast %13 : vector<8x1xf32> to vector<8x256xf32>
    %15 = arith.addf %12, %14 : vector<8x256xf32>
    %cst_16 = arith.constant 0.000000e+00 : f32
    %16 = vector.broadcast %cst_16 : f32 to vector<8x256xf32>
    %17 = arith.maximumf %15, %16 : vector<8x256xf32>
    %c0_17 = arith.constant 0 : index
    %c2 = arith.constant 2 : index
    %c0_18 = arith.constant 0 : index
    %c0_19 = arith.constant 0 : index
    %18 = vector.load %arg1[%c0_17, %c2, %c0_18, %c0_19] : memref<1x4x8x256xbf16, #tpu.memory_space<vmem>>, vector<1x1x8x256xbf16>
    %19 = vector.shape_cast %18 : vector<1x1x8x256xbf16> to vector<8x256xbf16>
    %c0_20 = arith.constant 0 : index
    %c0_21 = arith.constant 0 : index
    %20 = vector.load %arg3[%c0_20, %c0_21] : memref<8x8xbf16, #tpu.memory_space<vmem>>, vector<8x8xbf16>
    %cst_22 = arith.constant dense<0.000000e+00> : vector<8x256xf32>
    %21 = tpu.matmul %20, %19, %cst_22 {dimension_numbers = #tpu.dot_dimension_numbers<[1], [0], [0], [1], [0, 0, 1, 1], [], []>} : vector<8x8xbf16>, vector<8x256xbf16>, vector<8x256xf32> -> vector<8x256xf32>
    %c0_23 = arith.constant 0 : index
    %c0_24 = arith.constant 0 : index
    %22 = vector.load %arg7[%c0_23, %c0_24] : memref<8x1xf32, #tpu.memory_space<vmem>>, vector<8x1xf32>
    %23 = vector.broadcast %22 : vector<8x1xf32> to vector<8x256xf32>
    %24 = arith.addf %21, %23 : vector<8x256xf32>
    %cst_25 = arith.constant 0.000000e+00 : f32
    %25 = vector.broadcast %cst_25 : f32 to vector<8x256xf32>
    %26 = arith.maximumf %24, %25 : vector<8x256xf32>
    %c0_26 = arith.constant 0 : index
    %c3 = arith.constant 3 : index
    %c0_27 = arith.constant 0 : index
    %c0_28 = arith.constant 0 : index
    %27 = vector.load %arg1[%c0_26, %c3, %c0_27, %c0_28] : memref<1x4x8x256xbf16, #tpu.memory_space<vmem>>, vector<1x1x8x256xbf16>
    %28 = vector.shape_cast %27 : vector<1x1x8x256xbf16> to vector<8x256xbf16>
    %c0_29 = arith.constant 0 : index
    %c0_30 = arith.constant 0 : index
    %29 = vector.load %arg3[%c0_29, %c0_30] : memref<8x8xbf16, #tpu.memory_space<vmem>>, vector<8x8xbf16>
    %cst_31 = arith.constant dense<0.000000e+00> : vector<8x256xf32>
    %30 = tpu.matmul %29, %28, %cst_31 {dimension_numbers = #tpu.dot_dimension_numbers<[1], [0], [0], [1], [0, 0, 1, 1], [], []>} : vector<8x8xbf16>, vector<8x256xbf16>, vector<8x256xf32> -> vector<8x256xf32>
    %c0_32 = arith.constant 0 : index
    %c0_33 = arith.constant 0 : index
    %31 = vector.load %arg7[%c0_32, %c0_33] : memref<8x1xf32, #tpu.memory_space<vmem>>, vector<8x1xf32>
    %32 = vector.broadcast %31 : vector<8x1xf32> to vector<8x256xf32>
    %33 = arith.addf %30, %32 : vector<8x256xf32>
    %cst_34 = arith.constant 0.000000e+00 : f32
    %34 = vector.broadcast %cst_34 : f32 to vector<8x256xf32>
    %35 = arith.maximumf %33, %34 : vector<8x256xf32>
    %cst_35 = arith.constant 0.000000e+00 : f32
    %36 = vector.broadcast %cst_35 : f32 to vector<8x256xf32>
    %c17_i32 = arith.constant 17 : i32
    %37 = tpu.dynamic_rotate %35 by %c17_i32 dim 1 : vector<8x256xf32>, i32 -> vector<8x256xf32>
    %c0_36 = arith.constant 0 : index
    %c0_37 = arith.constant 0 : index
    %38 = vector.load %arg2[%c0_36, %c0_37] : memref<9x256xf32, #tpu.memory_space<vmem>>, vector<1x256xf32>
    %39 = vector.broadcast %38 : vector<1x256xf32> to vector<8x256xf32>
    %40 = arith.mulf %37, %39 : vector<8x256xf32>
    %c0_38 = arith.constant 0 : index
    %c0_39 = arith.constant 0 : index
    %c0_40 = arith.constant 0 : index
    %41 = vector.load %arg4[%c0_38, %c0_39, %c0_40] : memref<9x8x8xbf16, #tpu.memory_space<vmem>>, vector<1x8x8xbf16>
    %42 = vector.shape_cast %41 : vector<1x8x8xbf16> to vector<8x8xbf16>
    %43 = arith.truncf %40 : vector<8x256xf32> to vector<8x256xbf16>
    %cst_41 = arith.constant dense<0.000000e+00> : vector<8x256xf32>
    %44 = tpu.matmul %42, %43, %cst_41 {dimension_numbers = #tpu.dot_dimension_numbers<[1], [0], [0], [1], [0, 0, 1, 1], [], []>} : vector<8x8xbf16>, vector<8x256xbf16>, vector<8x256xf32> -> vector<8x256xf32>
    %45 = arith.addf %36, %44 : vector<8x256xf32>
    %c16_i32 = arith.constant 16 : i32
    %46 = tpu.dynamic_rotate %26 by %c16_i32 dim 1 : vector<8x256xf32>, i32 -> vector<8x256xf32>
    %c1_42 = arith.constant 1 : index
    %c0_43 = arith.constant 0 : index
    %47 = vector.load %arg2[%c1_42, %c0_43] : memref<9x256xf32, #tpu.memory_space<vmem>>, vector<1x256xf32>
    %48 = vector.broadcast %47 : vector<1x256xf32> to vector<8x256xf32>
    %49 = arith.mulf %46, %48 : vector<8x256xf32>
    %c1_44 = arith.constant 1 : index
    %c0_45 = arith.constant 0 : index
    %c0_46 = arith.constant 0 : index
    %50 = vector.load %arg4[%c1_44, %c0_45, %c0_46] : memref<9x8x8xbf16, #tpu.memory_space<vmem>>, vector<1x8x8xbf16>
    %51 = vector.shape_cast %50 : vector<1x8x8xbf16> to vector<8x8xbf16>
    %52 = arith.truncf %49 : vector<8x256xf32> to vector<8x256xbf16>
    %cst_47 = arith.constant dense<0.000000e+00> : vector<8x256xf32>
    %53 = tpu.matmul %51, %52, %cst_47 {dimension_numbers = #tpu.dot_dimension_numbers<[1], [0], [0], [1], [0, 0, 1, 1], [], []>} : vector<8x8xbf16>, vector<8x256xbf16>, vector<8x256xf32> -> vector<8x256xf32>
    %54 = arith.addf %45, %53 : vector<8x256xf32>
    %c16_i32_48 = arith.constant 16 : i32
    %55 = tpu.dynamic_rotate %35 by %c16_i32_48 dim 1 : vector<8x256xf32>, i32 -> vector<8x256xf32>
    %c2_49 = arith.constant 2 : index
    %c0_50 = arith.constant 0 : index
    %56 = vector.load %arg2[%c2_49, %c0_50] : memref<9x256xf32, #tpu.memory_space<vmem>>, vector<1x256xf32>
    %57 = vector.broadcast %56 : vector<1x256xf32> to vector<8x256xf32>
    %58 = arith.mulf %55, %57 : vector<8x256xf32>
    %c2_51 = arith.constant 2 : index
    %c0_52 = arith.constant 0 : index
    %c0_53 = arith.constant 0 : index
    %59 = vector.load %arg4[%c2_51, %c0_52, %c0_53] : memref<9x8x8xbf16, #tpu.memory_space<vmem>>, vector<1x8x8xbf16>
    %60 = vector.shape_cast %59 : vector<1x8x8xbf16> to vector<8x8xbf16>
    %61 = arith.truncf %58 : vector<8x256xf32> to vector<8x256xbf16>
    %cst_54 = arith.constant dense<0.000000e+00> : vector<8x256xf32>
    %62 = tpu.matmul %60, %61, %cst_54 {dimension_numbers = #tpu.dot_dimension_numbers<[1], [0], [0], [1], [0, 0, 1, 1], [], []>} : vector<8x8xbf16>, vector<8x256xbf16>, vector<8x256xf32> -> vector<8x256xf32>
    %63 = arith.addf %54, %62 : vector<8x256xf32>
    %c1_i32 = arith.constant 1 : i32
    %64 = tpu.dynamic_rotate %17 by %c1_i32 dim 1 : vector<8x256xf32>, i32 -> vector<8x256xf32>
    %c3_55 = arith.constant 3 : index
    %c0_56 = arith.constant 0 : index
    %65 = vector.load %arg2[%c3_55, %c0_56] : memref<9x256xf32, #tpu.memory_space<vmem>>, vector<1x256xf32>
    %66 = vector.broadcast %65 : vector<1x256xf32> to vector<8x256xf32>
    %67 = arith.mulf %64, %66 : vector<8x256xf32>
    %c3_57 = arith.constant 3 : index
    %c0_58 = arith.constant 0 : index
    %c0_59 = arith.constant 0 : index
    %68 = vector.load %arg4[%c3_57, %c0_58, %c0_59] : memref<9x8x8xbf16, #tpu.memory_space<vmem>>, vector<1x8x8xbf16>
    %69 = vector.shape_cast %68 : vector<1x8x8xbf16> to vector<8x8xbf16>
    %70 = arith.truncf %67 : vector<8x256xf32> to vector<8x256xbf16>
    %cst_60 = arith.constant dense<0.000000e+00> : vector<8x256xf32>
    %71 = tpu.matmul %69, %70, %cst_60 {dimension_numbers = #tpu.dot_dimension_numbers<[1], [0], [0], [1], [0, 0, 1, 1], [], []>} : vector<8x8xbf16>, vector<8x256xbf16>, vector<8x256xf32> -> vector<8x256xf32>
    %72 = arith.addf %63, %71 : vector<8x256xf32>
    %c4 = arith.constant 4 : index
    %c0_61 = arith.constant 0 : index
    %c0_62 = arith.constant 0 : index
    %73 = vector.load %arg4[%c4, %c0_61, %c0_62] : memref<9x8x8xbf16, #tpu.memory_space<vmem>>, vector<1x8x8xbf16>
    %74 = vector.shape_cast %73 : vector<1x8x8xbf16> to vector<8x8xbf16>
    %75 = arith.truncf %8 : vector<8x256xf32> to vector<8x256xbf16>
    %cst_63 = arith.constant dense<0.000000e+00> : vector<8x256xf32>
    %76 = tpu.matmul %74, %75, %cst_63 {dimension_numbers = #tpu.dot_dimension_numbers<[1], [0], [0], [1], [0, 0, 1, 1], [], []>} : vector<8x8xbf16>, vector<8x256xbf16>, vector<8x256xf32> -> vector<8x256xf32>
    %77 = arith.addf %72, %76 : vector<8x256xf32>
    %c5 = arith.constant 5 : index
    %c0_64 = arith.constant 0 : index
    %c0_65 = arith.constant 0 : index
    %78 = vector.load %arg4[%c5, %c0_64, %c0_65] : memref<9x8x8xbf16, #tpu.memory_space<vmem>>, vector<1x8x8xbf16>
    %79 = vector.shape_cast %78 : vector<1x8x8xbf16> to vector<8x8xbf16>
    %80 = arith.truncf %17 : vector<8x256xf32> to vector<8x256xbf16>
    %cst_66 = arith.constant dense<0.000000e+00> : vector<8x256xf32>
    %81 = tpu.matmul %79, %80, %cst_66 {dimension_numbers = #tpu.dot_dimension_numbers<[1], [0], [0], [1], [0, 0, 1, 1], [], []>} : vector<8x8xbf16>, vector<8x256xbf16>, vector<8x256xf32> -> vector<8x256xf32>
    %82 = arith.addf %77, %81 : vector<8x256xf32>
    %c1_i32_67 = arith.constant 1 : i32
    %83 = tpu.dynamic_rotate %35 by %c1_i32_67 dim 1 : vector<8x256xf32>, i32 -> vector<8x256xf32>
    %c6 = arith.constant 6 : index
    %c0_68 = arith.constant 0 : index
    %84 = vector.load %arg2[%c6, %c0_68] : memref<9x256xf32, #tpu.memory_space<vmem>>, vector<1x256xf32>
    %85 = vector.broadcast %84 : vector<1x256xf32> to vector<8x256xf32>
    %86 = arith.mulf %83, %85 : vector<8x256xf32>
    %c6_69 = arith.constant 6 : index
    %c0_70 = arith.constant 0 : index
    %c0_71 = arith.constant 0 : index
    %87 = vector.load %arg4[%c6_69, %c0_70, %c0_71] : memref<9x8x8xbf16, #tpu.memory_space<vmem>>, vector<1x8x8xbf16>
    %88 = vector.shape_cast %87 : vector<1x8x8xbf16> to vector<8x8xbf16>
    %89 = arith.truncf %86 : vector<8x256xf32> to vector<8x256xbf16>
    %cst_72 = arith.constant dense<0.000000e+00> : vector<8x256xf32>
    %90 = tpu.matmul %88, %89, %cst_72 {dimension_numbers = #tpu.dot_dimension_numbers<[1], [0], [0], [1], [0, 0, 1, 1], [], []>} : vector<8x8xbf16>, vector<8x256xbf16>, vector<8x256xf32> -> vector<8x256xf32>
    %91 = arith.addf %82, %90 : vector<8x256xf32>
    %c7 = arith.constant 7 : index
    %c0_73 = arith.constant 0 : index
    %c0_74 = arith.constant 0 : index
    %92 = vector.load %arg4[%c7, %c0_73, %c0_74] : memref<9x8x8xbf16, #tpu.memory_space<vmem>>, vector<1x8x8xbf16>
    %93 = vector.shape_cast %92 : vector<1x8x8xbf16> to vector<8x8xbf16>
    %94 = arith.truncf %26 : vector<8x256xf32> to vector<8x256xbf16>
    %cst_75 = arith.constant dense<0.000000e+00> : vector<8x256xf32>
    %95 = tpu.matmul %93, %94, %cst_75 {dimension_numbers = #tpu.dot_dimension_numbers<[1], [0], [0], [1], [0, 0, 1, 1], [], []>} : vector<8x8xbf16>, vector<8x256xbf16>, vector<8x256xf32> -> vector<8x256xf32>
    %96 = arith.addf %91, %95 : vector<8x256xf32>
    %c8 = arith.constant 8 : index
    %c0_76 = arith.constant 0 : index
    %c0_77 = arith.constant 0 : index
    %97 = vector.load %arg4[%c8, %c0_76, %c0_77] : memref<9x8x8xbf16, #tpu.memory_space<vmem>>, vector<1x8x8xbf16>
    %98 = vector.shape_cast %97 : vector<1x8x8xbf16> to vector<8x8xbf16>
    %99 = arith.truncf %35 : vector<8x256xf32> to vector<8x256xbf16>
    %cst_78 = arith.constant dense<0.000000e+00> : vector<8x256xf32>
    %100 = tpu.matmul %98, %99, %cst_78 {dimension_numbers = #tpu.dot_dimension_numbers<[1], [0], [0], [1], [0, 0, 1, 1], [], []>} : vector<8x8xbf16>, vector<8x256xbf16>, vector<8x256xf32> -> vector<8x256xf32>
    %101 = arith.addf %96, %100 : vector<8x256xf32>
    %c0_79 = arith.constant 0 : index
    %c0_80 = arith.constant 0 : index
    %102 = vector.load %arg8[%c0_79, %c0_80] : memref<8x1xf32, #tpu.memory_space<vmem>>, vector<8x1xf32>
    %103 = vector.broadcast %102 : vector<8x1xf32> to vector<8x256xf32>
    %104 = arith.addf %101, %103 : vector<8x256xf32>
    %cst_81 = arith.constant 0.000000e+00 : f32
    %105 = vector.broadcast %cst_81 : f32 to vector<8x256xf32>
    %106 = arith.maximumf %104, %105 : vector<8x256xf32>
    %c0_82 = arith.constant 0 : index
    %c0_83 = arith.constant 0 : index
    %107 = vector.load %arg6[%c0_82, %c0_83] : memref<32x8xbf16, #tpu.memory_space<vmem>>, vector<32x8xbf16>
    %c0_84 = arith.constant 0 : index
    %c0_85 = arith.constant 0 : index
    %c0_86 = arith.constant 0 : index
    %c0_87 = arith.constant 0 : index
    %108 = vector.load %arg1[%c0_84, %c0_85, %c0_86, %c0_87] : memref<1x4x8x256xbf16, #tpu.memory_space<vmem>>, vector<1x1x8x256xbf16>
    %109 = vector.shape_cast %108 : vector<1x1x8x256xbf16> to vector<8x256xbf16>
    %cst_88 = arith.constant dense<0.000000e+00> : vector<32x256xf32>
    %110 = tpu.matmul %107, %109, %cst_88 {dimension_numbers = #tpu.dot_dimension_numbers<[1], [0], [0], [1], [0, 0, 1, 1], [], []>} : vector<32x8xbf16>, vector<8x256xbf16>, vector<32x256xf32> -> vector<32x256xf32>
    %c0_89 = arith.constant 0 : index
    %c0_90 = arith.constant 0 : index
    %111 = vector.load %arg10[%c0_89, %c0_90] : memref<32x1xf32, #tpu.memory_space<vmem>>, vector<32x1xf32>
    %112 = vector.broadcast %111 : vector<32x1xf32> to vector<32x256xf32>
    %113 = arith.addf %110, %112 : vector<32x256xf32>
    %c0_91 = arith.constant 0 : index
    %c0_92 = arith.constant 0 : index
    %114 = vector.load %arg5[%c0_91, %c0_92] : memref<32x8xbf16, #tpu.memory_space<vmem>>, vector<32x8xbf16>
    %115 = arith.truncf %106 : vector<8x256xf32> to vector<8x256xbf16>
    %cst_93 = arith.constant dense<0.000000e+00> : vector<32x256xf32>
    %116 = tpu.matmul %114, %115, %cst_93 {dimension_numbers = #tpu.dot_dimension_numbers<[1], [0], [0], [1], [0, 0, 1, 1], [], []>} : vector<32x8xbf16>, vector<8x256xbf16>, vector<32x256xf32> -> vector<32x256xf32>
    %c0_94 = arith.constant 0 : index
    %c0_95 = arith.constant 0 : index
    %117 = vector.load %arg9[%c0_94, %c0_95] : memref<32x1xf32, #tpu.memory_space<vmem>>, vector<32x1xf32>
    %118 = vector.broadcast %117 : vector<32x1xf32> to vector<32x256xf32>
    %119 = arith.addf %116, %118 : vector<32x256xf32>
    %120 = arith.addf %119, %113 : vector<32x256xf32>
    %cst_96 = arith.constant 0.000000e+00 : f32
    %121 = vector.broadcast %cst_96 : f32 to vector<32x256xf32>
    %122 = arith.maximumf %120, %121 : vector<32x256xf32>
    %c0_97 = arith.constant 0 : index
    %c0_98 = arith.constant 0 : index
    %c0_99 = arith.constant 0 : index
    %123 = vector.load %arg11[%c0_97, %c0_98, %c0_99] : memref<1x32x256xf32, #tpu.memory_space<vmem>>, vector<1x32x256xf32>
    %124 = vector.shape_cast %123 : vector<1x32x256xf32> to vector<32x256xf32>
    %125 = vector.shape_cast %122 : vector<32x256xf32> to vector<1x32x256xf32>
    tpu.vector_store %arg11[%c0_97, %c0_98, %c0_99], %125 {strides = array<i32>} : memref<1x32x256xf32, #tpu.memory_space<vmem>>, vector<1x32x256xf32>,
    return
  }
  func.func @transform_0(%arg0: i32) -> (i32, i32, i32, i32) {
    %c0_i32 = arith.constant 0 : i32
    %c0_i32_0 = arith.constant 0 : i32
    %c0_i32_1 = arith.constant 0 : i32
    %c0_i32_2 = arith.constant 0 : i32
    return %arg0, %c0_i32, %c0_i32_0, %c0_i32_1 : i32, i32, i32, i32
  }
  func.func @transform_1(%arg0: i32) -> (i32, i32) {
    %c0_i32 = arith.constant 0 : i32
    %c0_i32_0 = arith.constant 0 : i32
    %c0_i32_1 = arith.constant 0 : i32
    return %c0_i32, %c0_i32_0 : i32, i32
  }
  func.func @transform_2(%arg0: i32) -> (i32, i32) {
    %c0_i32 = arith.constant 0 : i32
    %c0_i32_0 = arith.constant 0 : i32
    %c0_i32_1 = arith.constant 0 : i32
    return %c0_i32, %c0_i32_0 : i32, i32
  }
  func.func @transform_3(%arg0: i32) -> (i32, i32, i32) {
    %c0_i32 = arith.constant 0 : i32
    %c0_i32_0 = arith.constant 0 : i32
    %c0_i32_1 = arith.constant 0 : i32
    %c0_i32_2 = arith.constant 0 : i32
    return %c0_i32, %c0_i32_0, %c0_i32_1 : i32, i32, i32
  }
  func.func @transform_4(%arg0: i32) -> (i32, i32) {
    %c0_i32 = arith.constant 0 : i32
    %c0_i32_0 = arith.constant 0 : i32
    %c0_i32_1 = arith.constant 0 : i32
    return %c0_i32, %c0_i32_0 : i32, i32
  }
  func.func @transform_5(%arg0: i32) -> (i32, i32) {
    %c0_i32 = arith.constant 0 : i32
    %c0_i32_0 = arith.constant 0 : i32
    %c0_i32_1 = arith.constant 0 : i32
    return %c0_i32, %c0_i32_0 : i32, i32
  }
  func.func @transform_6(%arg0: i32) -> (i32, i32) {
    %c0_i32 = arith.constant 0 : i32
    %c0_i32_0 = arith.constant 0 : i32
    %c0_i32_1 = arith.constant 0 : i32
    return %c0_i32, %c0_i32_0 : i32, i32
  }
  func.func @transform_7(%arg0: i32) -> (i32, i32) {
    %c0_i32 = arith.constant 0 : i32
    %c0_i32_0 = arith.constant 0 : i32
    %c0_i32_1 = arith.constant 0 : i32
    return %c0_i32, %c0_i32_0 : i32, i32
  }
  func.func @transform_8(%arg0: i32) -> (i32, i32) {
    %c0_i32 = arith.constant 0 : i32
    %c0_i32_0 = arith.constant 0 : i32
    %c0_i32_1 = arith.constant 0 : i32
    return %c0_i32, %c0_i32_0 : i32, i32
  }
  func.func @transform_9(%arg0: i32) -> (i32, i32) {
    %c0_i32 = arith.constant 0 : i32
    %c0_i32_0 = arith.constant 0 : i32
    %c0_i32_1 = arith.constant 0 : i32
    return %c0_i32, %c0_i32_0 : i32, i32
  }
  func.func @transform_10(%arg0: i32) -> (i32, i32, i32) {
    %c0_i32 = arith.constant 0 : i32
    %c0_i32_0 = arith.constant 0 : i32
    %c0_i32_1 = arith.constant 0 : i32
    return %arg0, %c0_i32, %c0_i32_0 : i32, i32, i32
  }
}

</mosaic_0001>

<llo_original>
// kernel: bottleneck_forward.1
$region0: #{bottleneck_forward.1}
  #allocation0 [shape = 'u32[]', space=smem, size = 0x4, offset = 0x4, fixed_abs, tag = 'smem constant byte address 0x4 - core index']
  #allocation1 [shape = 'u32[144,128]{1,0:T(1,128)}', space=vmem, size = 0x12000, scoped, tag = 'internal scratch']
  %s0 = inlined_call_operand.vmem [shape: bf16[2,4,8,256], index: 0, kind: input, shape index: {}]
  %s1 = inlined_call_operand.vmem [shape: f32[9,256], index: 1, kind: input, shape index: {}]
  %s2 = inlined_call_operand.vmem [shape: bf16[8,8], index: 2, kind: input, shape index: {}]
  %s3 = inlined_call_operand.vmem [shape: bf16[9,8,8], index: 3, kind: input, shape index: {}]
  %s4 = inlined_call_operand.vmem [shape: bf16[32,8], index: 4, kind: input, shape index: {}]
  %s5 = inlined_call_operand.vmem [shape: bf16[32,8], index: 5, kind: input, shape index: {}]
  %s6 = inlined_call_operand.vmem [shape: f32[8,1], index: 6, kind: input, shape index: {}]
  %s7 = inlined_call_operand.vmem [shape: f32[8,1], index: 7, kind: input, shape index: {}]
  %s8 = inlined_call_operand.vmem [shape: f32[32,1], index: 8, kind: input, shape index: {}]
  %s9 = inlined_call_operand.vmem [shape: f32[32,1], index: 9, kind: input, shape index: {}]
  %s10 = inlined_call_operand.vmem [shape: f32[2,32,256], index: 10, kind: output, shape index: {}]
  %s11 = sld [smem:[#allocation0]]
  $region73: #{bottleneck_forward.1} parent=0
    _
  %s13 = ssub.s32 1, %s11
  %s14 = scalar_select 0, %s13, %s11
  loop: start=0, step=1, limit=4
  $region2: #{bottleneck_forward.1} parent=0 // loop_pre_header
    _
  $region3: #{bottleneck_forward.1} parent=0 // loop_header
    %s16 = sphi 0, %s20
    %p17 = scmp.ge.s32.totalorder %s16, 4
    %s26 = sphi 0, %s28
    %s29 = sphi 0, %s26
    %s30 = sphi 0, %s29
    %s46 = sphi 0, %s30
    %s50 = sphi 0, %s50
    %s52 = sphi 0, %s50
    %s53 = sphi 0, %s52
    %s67 = sphi 0, %s53
    %s71 = sphi 0, %s71
    %s73 = sphi 0, %s71
    %s74 = sphi 0, %s73
    %s88 = sphi 0, %s74
    %s92 = sphi 0, %s92
    %s94 = sphi 0, %s92
    %s95 = sphi 0, %s94
    %s109 = sphi 0, %s95
    %s113 = sphi 0, %s113
    %s115 = sphi 0, %s113
    %s116 = sphi 0, %s115
    %s130 = sphi 0, %s116
    %s134 = sphi 0, %s134
    %s136 = sphi 0, %s134
    %s137 = sphi 0, %s136
    %s151 = sphi 0, %s137
    %s155 = sphi 0, %s155
    %s157 = sphi 0, %s155
    %s158 = sphi 0, %s157
    %s172 = sphi 0, %s158
    %s176 = sphi 0, %s176
    %s178 = sphi 0, %s176
    %s179 = sphi 0, %s178
    %s193 = sphi 0, %s179
    %s197 = sphi 0, %s197
    %s199 = sphi 0, %s197
    %s200 = sphi 0, %s199
    %s214 = sphi 0, %s200
    %s218 = sphi 0, %s218
    %s220 = sphi 0, %s218
    %s221 = sphi 0, %s220
    %s235 = sphi 0, %s221
    %s241 = sphi 0, %s243
    %s244 = sphi 0, %s241
    %s245 = sphi 0, %s244
    %s261 = sphi 0, %s245
  $region4: #{bottleneck_forward.1} parent=0 // loop_header_branch
    %19 = sbr.rel (%p17) target = $region8
  $region5: #{bottleneck_forward.1} parent=0 // loop_body
    %s21 = ssub.s32 %s16, 1
    %s22 = ssub.s32 %s16, 2
    %s23 = sadd.s32 %s16, 1
    %s24 = ssub.s32 %s16, %s23
    %p25 = scmp.eq.s32.totalorder %s24, 0
    %s27 = sadd.s32 %s26, 1
    %s28 = scalar_select %p25, %s26, %s27
    %p31 = pneg %p25
    %p32 = scmp.eq.s32.totalorder %s16, 1
    %p33 = por %p31, %p32
    %p34 = scmp.ne.s32.totalorder %s26, %s29
    %p35 = scmp.eq.s32.totalorder %s16, 0
    %p36 = por %p34, %p35
    %p37 = scmp.ne.s32.totalorder %s26, %s29
    %p38 = scmp.eq.s32.totalorder %s21, 1
    %p39 = por %p37, %p38
    %p40 = scmp.ne.s32.totalorder %s29, %s30
    %p41 = scmp.eq.s32.totalorder %s21, 0
    %p42 = por %p40, %p41
    %p43 = scmp.ne.s32.totalorder %s29, %s30
    %p44 = scmp.eq.s32.totalorder %s22, 1
    %p45 = por %p43, %p44
    %p47 = scmp.ne.s32.totalorder %s30, %s46
    %p48 = scmp.eq.s32.totalorder %s22, 0
    %p49 = por %p47, %p48
    %s51 = sadd.s32 %s50, 1
    %p54 = scmp.eq.s32.totalorder %s16, 1
    %p55 = scmp.ne.s32.totalorder %s50, %s52
    %p56 = scmp.eq.s32.totalorder %s16, 0
    %p57 = por %p55, %p56
    %p58 = scmp.ne.s32.totalorder %s50, %s52
    %p59 = scmp.eq.s32.totalorder %s21, 1
    %p60 = por %p58, %p59
    %p61 = scmp.ne.s32.totalorder %s52, %s53
    %p62 = scmp.eq.s32.totalorder %s21, 0
    %p63 = por %p61, %p62
    %p64 = scmp.ne.s32.totalorder %s52, %s53
    %p65 = scmp.eq.s32.totalorder %s22, 1
    %p66 = por %p64, %p65
    %p68 = scmp.ne.s32.totalorder %s53, %s67
    %p69 = scmp.eq.s32.totalorder %s22, 0
    %p70 = por %p68, %p69
    %s72 = sadd.s32 %s71, 1
    %p75 = scmp.eq.s32.totalorder %s16, 1
    %p76 = scmp.ne.s32.totalorder %s71, %s73
    %p77 = scmp.eq.s32.totalorder %s16, 0
    %p78 = por %p76, %p77
    %p79 = scmp.ne.s32.totalorder %s71, %s73
    %p80 = scmp.eq.s32.totalorder %s21, 1
    %p81 = por %p79, %p80
    %p82 = scmp.ne.s32.totalorder %s73, %s74
    %p83 = scmp.eq.s32.totalorder %s21, 0
    %p84 = por %p82, %p83
    %p85 = scmp.ne.s32.totalorder %s73, %s74
    %p86 = scmp.eq.s32.totalorder %s22, 1
    %p87 = por %p85, %p86
    %p89 = scmp.ne.s32.totalorder %s74, %s88
    %p90 = scmp.eq.s32.totalorder %s22, 0
    %p91 = por %p89, %p90
    %s93 = sadd.s32 %s92, 1
    %p96 = scmp.eq.s32.totalorder %s16, 1
    %p97 = scmp.ne.s32.totalorder %s92, %s94
    %p98 = scmp.eq.s32.totalorder %s16, 0
    %p99 = por %p97, %p98
    %p100 = scmp.ne.s32.totalorder %s92, %s94
    %p101 = scmp.eq.s32.totalorder %s21, 1
    %p102 = por %p100, %p101
    %p103 = scmp.ne.s32.totalorder %s94, %s95
    %p104 = scmp.eq.s32.totalorder %s21, 0
    %p105 = por %p103, %p104
    %p106 = scmp.ne.s32.totalorder %s94, %s95
    %p107 = scmp.eq.s32.totalorder %s22, 1
    %p108 = por %p106, %p107
    %p110 = scmp.ne.s32.totalorder %s95, %s109
    %p111 = scmp.eq.s32.totalorder %s22, 0
    %p112 = por %p110, %p111
    %s114 = sadd.s32 %s113, 1
    %p117 = scmp.eq.s32.totalorder %s16, 1
    %p118 = scmp.ne.s32.totalorder %s113, %s115
    %p119 = scmp.eq.s32.totalorder %s16, 0
    %p120 = por %p118, %p119
    %p121 = scmp.ne.s32.totalorder %s113, %s115
    %p122 = scmp.eq.s32.totalorder %s21, 1
    %p123 = por %p121, %p122
    %p124 = scmp.ne.s32.totalorder %s115, %s116
    %p125 = scmp.eq.s32.totalorder %s21, 0
    %p126 = por %p124, %p125
    %p127 = scmp.ne.s32.totalorder %s115, %s116
    %p128 = scmp.eq.s32.totalorder %s22, 1
    %p129 = por %p127, %p128
    %p131 = scmp.ne.s32.totalorder %s116, %s130
    %p132 = scmp.eq.s32.totalorder %s22, 0
    %p133 = por %p131, %p132
    %s135 = sadd.s32 %s134, 1
    %p138 = scmp.eq.s32.totalorder %s16, 1
    %p139 = scmp.ne.s32.totalorder %s134, %s136
    %p140 = scmp.eq.s32.totalorder %s16, 0
    %p141 = por %p139, %p140
    %p142 = scmp.ne.s32.totalorder %s134, %s136
    %p143 = scmp.eq.s32.totalorder %s21, 1
    %p144 = por %p142, %p143
    %p145 = scmp.ne.s32.totalorder %s136, %s137
    %p146 = scmp.eq.s32.totalorder %s21, 0
    %p147 = por %p145, %p146
    %p148 = scmp.ne.s32.totalorder %s136, %s137
    %p149 = scmp.eq.s32.totalorder %s22, 1
    %p150 = por %p148, %p149
    %p152 = scmp.ne.s32.totalorder %s137, %s151
    %p153 = scmp.eq.s32.totalorder %s22, 0
    %p154 = por %p152, %p153
    %s156 = sadd.s32 %s155, 1
    %p159 = scmp.eq.s32.totalorder %s16, 1
    %p160 = scmp.ne.s32.totalorder %s155, %s157
    %p161 = scmp.eq.s32.totalorder %s16, 0
    %p162 = por %p160, %p161
    %p163 = scmp.ne.s32.totalorder %s155, %s157
    %p164 = scmp.eq.s32.totalorder %s21, 1
    %p165 = por %p163, %p164
    %p166 = scmp.ne.s32.totalorder %s157, %s158
    %p167 = scmp.eq.s32.totalorder %s21, 0
    %p168 = por %p166, %p167
    %p169 = scmp.ne.s32.totalorder %s157, %s158
    %p170 = scmp.eq.s32.totalorder %s22, 1
    %p171 = por %p169, %p170
    %p173 = scmp.ne.s32.totalorder %s158, %s172
    %p174 = scmp.eq.s32.totalorder %s22, 0
    %p175 = por %p173, %p174
    %s177 = sadd.s32 %s176, 1
    %p180 = scmp.eq.s32.totalorder %s16, 1
    %p181 = scmp.ne.s32.totalorder %s176, %s178
    %p182 = scmp.eq.s32.totalorder %s16, 0
    %p183 = por %p181, %p182
    %p184 = scmp.ne.s32.totalorder %s176, %s178
    %p185 = scmp.eq.s32.totalorder %s21, 1
    %p186 = por %p184, %p185
    %p187 = scmp.ne.s32.totalorder %s178, %s179
    %p188 = scmp.eq.s32.totalorder %s21, 0
    %p189 = por %p187, %p188
    %p190 = scmp.ne.s32.totalorder %s178, %s179
    %p191 = scmp.eq.s32.totalorder %s22, 1
    %p192 = por %p190, %p191
    %p194 = scmp.ne.s32.totalorder %s179, %s193
    %p195 = scmp.eq.s32.totalorder %s22, 0
    %p196 = por %p194, %p195
    %s198 = sadd.s32 %s197, 1
    %p201 = scmp.eq.s32.totalorder %s16, 1
    %p202 = scmp.ne.s32.totalorder %s197, %s199
    %p203 = scmp.eq.s32.totalorder %s16, 0
    %p204 = por %p202, %p203
    %p205 = scmp.ne.s32.totalorder %s197, %s199
    %p206 = scmp.eq.s32.totalorder %s21, 1
    %p207 = por %p205, %p206
    %p208 = scmp.ne.s32.totalorder %s199, %s200
    %p209 = scmp.eq.s32.totalorder %s21, 0
    %p210 = por %p208, %p209
    %p211 = scmp.ne.s32.totalorder %s199, %s200
    %p212 = scmp.eq.s32.totalorder %s22, 1
    %p213 = por %p211, %p212
    %p215 = scmp.ne.s32.totalorder %s200, %s214
    %p216 = scmp.eq.s32.totalorder %s22, 0
    %p217 = por %p215, %p216
    %s219 = sadd.s32 %s218, 1
    %p222 = scmp.eq.s32.totalorder %s16, 1
    %p223 = scmp.ne.s32.totalorder %s218, %s220
    %p224 = scmp.eq.s32.totalorder %s16, 0
    %p225 = por %p223, %p224
    %p226 = scmp.ne.s32.totalorder %s218, %s220
    %p227 = scmp.eq.s32.totalorder %s21, 1
    %p228 = por %p226, %p227
    %p229 = scmp.ne.s32.totalorder %s220, %s221
    %p230 = scmp.eq.s32.totalorder %s21, 0
    %p231 = por %p229, %p230
    %p232 = scmp.ne.s32.totalorder %s220, %s221
    %p233 = scmp.eq.s32.totalorder %s22, 1
    %p234 = por %p232, %p233
    %p236 = scmp.ne.s32.totalorder %s221, %s235
    %p237 = scmp.eq.s32.totalorder %s22, 0
    %p238 = por %p236, %p237
    %s239 = ssub.s32 %s16, %s23
    %p240 = scmp.eq.s32.totalorder %s239, 0
    %s242 = sadd.s32 %s241, 1
    %s243 = scalar_select %p240, %s241, %s242
    %p246 = pneg %p240
    %p247 = scmp.eq.s32.totalorder %s16, 1
    %p248 = por %p246, %p247
    %p249 = scmp.ne.s32.totalorder %s241, %s244
    %p250 = scmp.eq.s32.totalorder %s16, 0
    %p251 = por %p249, %p250
    %p252 = scmp.ne.s32.totalorder %s241, %s244
    %p253 = scmp.eq.s32.totalorder %s21, 1
    %p254 = por %p252, %p253
    %p255 = scmp.ne.s32.totalorder %s244, %s245
    %p256 = scmp.eq.s32.totalorder %s21, 0
    %p257 = por %p255, %p256
    %p258 = scmp.ne.s32.totalorder %s244, %s245
    %p259 = scmp.eq.s32.totalorder %s22, 1
    %p260 = por %p258, %p259
    %p262 = scmp.ne.s32.totalorder %s245, %s261
    %p263 = scmp.eq.s32.totalorder %s22, 0
    %p264 = por %p262, %p263
    %p265 = scmp.le.s32.totalorder 1, %s16
    %p266 = scmp.lt.s32.totalorder %s16, 3
    %p267 = pnand %p265, %p266
    %p268 = pneg %p267
    // Predicated region
    $region9: #{bottleneck_forward.1} parent=5 // pred_check
      _
    $region10: #{bottleneck_forward.1} parent=5 // pred_check_branch
      %270 = sbr.rel (%p267) target = $region12
    $region11: #{bottleneck_forward.1} parent=5 // pred_region
      %s271 = ssub.s32 %s16, 1
      // Predicated region
      $region13: #{bottleneck_forward.1} parent=11 // pred_check
        %p272 = pneg %p63
      $region14: #{bottleneck_forward.1} parent=11 // pred_check_branch
        %274 = sbr.rel (%p272) target = $region16
      $region15: #{bottleneck_forward.1} parent=11 // pred_region
        _
      $region16: #{bottleneck_forward.1} parent=11 // pred_fallthru
        _
      // Predicated region
      $region17: #{bottleneck_forward.1} parent=11 // pred_check
        %p275 = pneg %p84
      $region18: #{bottleneck_forward.1} parent=11 // pred_check_branch
        %277 = sbr.rel (%p275) target = $region20
      $region19: #{bottleneck_forward.1} parent=11 // pred_region
        _
      $region20: #{bottleneck_forward.1} parent=11 // pred_fallthru
        _
      // Predicated region
      $region21: #{bottleneck_forward.1} parent=11 // pred_check
        %p278 = pneg %p105
      $region22: #{bottleneck_forward.1} parent=11 // pred_check_branch
        %280 = sbr.rel (%p278) target = $region24
      $region23: #{bottleneck_forward.1} parent=11 // pred_region
        _
      $region24: #{bottleneck_forward.1} parent=11 // pred_fallthru
        _
      // Predicated region
      $region25: #{bottleneck_forward.1} parent=11 // pred_check
        %p281 = pneg %p126
      $region26: #{bottleneck_forward.1} parent=11 // pred_check_branch
        %283 = sbr.rel (%p281) target = $region28
      $region27: #{bottleneck_forward.1} parent=11 // pred_region
        _
      $region28: #{bottleneck_forward.1} parent=11 // pred_fallthru
        _
      // Predicated region
      $region29: #{bottleneck_forward.1} parent=11 // pred_check
        %p284 = pneg %p147
      $region30: #{bottleneck_forward.1} parent=11 // pred_check_branch
        %286 = sbr.rel (%p284) target = $region32
      $region31: #{bottleneck_forward.1} parent=11 // pred_region
        _
      $region32: #{bottleneck_forward.1} parent=11 // pred_fallthru
        _
      // Predicated region
      $region33: #{bottleneck_forward.1} parent=11 // pred_check
        %p287 = pneg %p168
      $region34: #{bottleneck_forward.1} parent=11 // pred_check_branch
        %289 = sbr.rel (%p287) target = $region36
      $region35: #{bottleneck_forward.1} parent=11 // pred_region
        _
      $region36: #{bottleneck_forward.1} parent=11 // pred_fallthru
        _
      // Predicated region
      $region37: #{bottleneck_forward.1} parent=11 // pred_check
        %p290 = pneg %p189
      $region38: #{bottleneck_forward.1} parent=11 // pred_check_branch
        %292 = sbr.rel (%p290) target = $region40
      $region39: #{bottleneck_forward.1} parent=11 // pred_region
        _
      $region40: #{bottleneck_forward.1} parent=11 // pred_fallthru
        _
      // Predicated region
      $region41: #{bottleneck_forward.1} parent=11 // pred_check
        %p293 = pneg %p210
      $region42: #{bottleneck_forward.1} parent=11 // pred_check_branch
        %295 = sbr.rel (%p293) target = $region44
      $region43: #{bottleneck_forward.1} parent=11 // pred_region
        _
      $region44: #{bottleneck_forward.1} parent=11 // pred_fallthru
        _
      // Predicated region
      $region45: #{bottleneck_forward.1} parent=11 // pred_check
        %p296 = pneg %p231
      $region46: #{bottleneck_forward.1} parent=11 // pred_check_branch
        %298 = sbr.rel (%p296) target = $region48
      $region47: #{bottleneck_forward.1} parent=11 // pred_region
        _
      $region48: #{bottleneck_forward.1} parent=11 // pred_fallthru
        _
    $region12: #{bottleneck_forward.1} parent=5 // pred_fallthru
      _
    %p299 = scmp.lt.s32.totalorder %s16, 2
    // Predicated region
    $region49: #{bottleneck_forward.1} parent=5 // pred_check
      %p300 = pneg %p299
    $region50: #{bottleneck_forward.1} parent=5 // pred_check_branch
      %302 = sbr.rel (%p300) target = $region52
    $region51: #{bottleneck_forward.1} parent=5 // pred_region
      // Predicated region
      $region53: #{bottleneck_forward.1} parent=51 // pred_check
        %p303 = pneg %p36
      $region54: #{bottleneck_forward.1} parent=51 // pred_check_branch
        %305 = sbr.rel (%p303) target = $region56
      $region55: #{bottleneck_forward.1} parent=51 // pred_region
        %p306 = scmp.lt.s32.totalorder %s16, 1
        %s307 = scalar_select %p306, %s16, 1
        %s308 = smul.addr %s307, 8
        %s309 = smul.addr %s308, 4
        %s310 = scalar_lea.vmem %s0, %s309
      $region56: #{bottleneck_forward.1} parent=51 // pred_fallthru
        _
    $region52: #{bottleneck_forward.1} parent=5 // pred_fallthru
      _
    %p311 = scmp.le.s32.totalorder 1, %s16
    %p312 = scmp.lt.s32.totalorder %s16, 3
    %p313 = pnand %p311, %p312
    %p314 = pneg %p313
    // Predicated region
    $region57: #{bottleneck_forward.1} parent=5 // pred_check
      _
    $region58: #{bottleneck_forward.1} parent=5 // pred_check_branch
      %316 = sbr.rel (%p313) target = $region60
    $region59: #{bottleneck_forward.1} parent=5 // pred_region
      %s317 = ssub.s32 %s16, 1
      %p318 = scmp.lt.s32.totalorder %s21, 1
      %s319 = scalar_select %p318, %s21, 1
      %s320 = smul.addr %s319, 8
      %s321 = smul.addr %s320, 4
      %s322 = scalar_lea.vmem %s0, %s321
      %p323 = pneg %p42
      %p324 = pneg %p39
      %p325 = pneg %p63
      %p326 = pneg %p60
      %p327 = pneg %p84
      %p328 = pneg %p81
      %p329 = pneg %p105
      %p330 = pneg %p102
      %p331 = pneg %p126
      %p332 = pneg %p123
      %p333 = pneg %p147
      %p334 = pneg %p144
      %p335 = pneg %p168
      %p336 = pneg %p165
      %p337 = pneg %p189
      %p338 = pneg %p186
      %p339 = pneg %p210
      %p340 = pneg %p207
      %p341 = pneg %p231
      %p342 = pneg %p228
      %p343 = pneg %p257
      %p344 = pneg %p254
      %p345 = scmp.lt.s32.totalorder %s21, 1
      %s346 = scalar_select %p345, %s21, 1
      %s347 = smul.addr %s346, 8
      %s348 = smul.addr %s347, 8
      %s349 = scalar_lea.vmem %s10, %s348
      %p350 = scmp.lt.s32.totalorder %s21, 1
      %s351 = scalar_select %p350, %s21, 1
      %s352 = smul.addr %s351, 8
      %s353 = smul.addr %s352, 4
      %s354 = scalar_lea.vmem %s0, %s353
      %p355 = scmp.lt.s32.totalorder %s21, 1
      %s356 = scalar_select %p355, %s21, 1
      %s357 = smul.addr %s356, 8
      %s358 = smul.addr %s357, 8
      %s359 = scalar_lea.vmem %s10, %s358
      %v361 = vld [vmem:[%s354] sm:$0xff]
      %v362 = vld [vmem:[%s2] sm:$0xf]
      %v363 = vld [vmem:[%s6] sm:$0xff]
      %365 = vset.pattern.permute.xlu0 0
      %366 = vperm.xlu0 %365, %v363
      %v367 = vpop.permute.xlu0 %366
      %v370 = vunpack.c.l.b16 %v361
      %v371 = vunpack.c.h.b16 %v361
      %v372 = vpack.c.b16 %v370, %v370
      %v373 = vpack.c.b16 %v371, %v371
      %vm374 = vcmask 64512
      %v376 = vsel %vm374, %v362, 0
      %vm378 = vcmask 1043456
      %v380 = vsel %vm378, %v372, 0
      %v383 = vsel %vm378, %v373, 0
      %385 = vmatprep.subr.bf16.mxu0 %v383
      %386 = vmatpush1.bf16.msra.mxu0 %v380
      %387 = vmatprep.subr.bf16.mxu0 0
      %388 = vmatpush1.bf16.msra.mxu0 0
      %389 = vmatprep.subr.bf16.mxu0 0
      %390 = vmatpush1.bf16.msra.mxu0 0
      %391 = vmatprep.subr.bf16.mxu0 0
      %392 = vmatpush1.bf16.msra.mxu0 0
      %393 = vmatprep.subr.bf16.mxu0 0
      %394 = vmatpush1.bf16.msra.mxu0 0
      %395 = vmatprep.subr.bf16.mxu0 0
      %396 = vmatpush1.bf16.msra.mxu0 0
      %397 = vmatprep.subr.bf16.mxu0 0
      %398 = vmatpush1.bf16.msra.mxu0 0
      %399 = vmatprep.subr.bf16.mxu0 0
      %400 = vmatpush1.bf16.msra.mxu0 0
      %401 = vmatprep.subr.bf16.mxu0 0
      %402 = vmatpush1.bf16.msra.mxu0 0
      %403 = vmatprep.subr.bf16.mxu0 0
      %404 = vmatpush1.bf16.msra.mxu0 0
      %405 = vmatprep.subr.bf16.mxu0 0
      %406 = vmatpush1.bf16.msra.mxu0 0
      %407 = vmatprep.subr.bf16.mxu0 0
      %408 = vmatpush1.bf16.msra.mxu0 0
      %409 = vmatprep.subr.bf16.mxu0 0
      %410 = vmatpush1.bf16.msra.mxu0 0
      %411 = vmatprep.subr.bf16.mxu0 0
      %412 = vmatpush1.bf16.msra.mxu0 0
      %413 = vmatprep.subr.bf16.mxu0 0
      %414 = vmatpush1.bf16.msra.mxu0 0
      %415 = vmatprep.subr.bf16.mxu0 0
      %416 = vmatpush1.bf16.msra.mxu0 0
      %417 = vmatprep.mubr.bf16.mxu0 0
      %418 = vmatmul.mubr.bf16.gmra.mrb[0].mxu0 %v376
      %v419 = vpop.f32.mrb[0].mxu0
      %v420 = vadd.f32 %v367, %v419
      %v421 = vpop.f32.mrb[0].mxu0
      %v422 = vadd.f32 %v367, %v421
      %v423 = vpop.f32.mrb[0].mxu0
      %v424 = vpop.f32.mrb[0].mxu0
      %425 = vdwg.mxu0
      %v426 = vmax.f32 %v420, 0.0
      %v427 = vmax.f32 %v422, 0.0
      %s428 = scalar_lea.vmem %s354, 8
      %v429 = vld [vmem:[%s428] sm:$0xff]
      %v431 = vunpack.c.l.b16 %v429
      %v432 = vunpack.c.h.b16 %v429
      %v433 = vpack.c.b16 %v431, %v431
      %v434 = vpack.c.b16 %v432, %v432
      %v436 = vsel %vm378, %v433, 0
      %v439 = vsel %vm378, %v434, 0
      %441 = vmatprep.subr.bf16.mxu0 %v439
      %442 = vmatpush1.bf16.msra.mxu0 %v436
      %443 = vmatprep.subr.bf16.mxu0 0
      %444 = vmatpush1.bf16.msra.mxu0 0
      %445 = vmatprep.subr.bf16.mxu0 0
      %446 = vmatpush1.bf16.msra.mxu0 0
      %447 = vmatprep.subr.bf16.mxu0 0
      %448 = vmatpush1.bf16.msra.mxu0 0
      %449 = vmatprep.subr.bf16.mxu0 0
      %450 = vmatpush1.bf16.msra.mxu0 0
      %451 = vmatprep.subr.bf16.mxu0 0
      %452 = vmatpush1.bf16.msra.mxu0 0
      %453 = vmatprep.subr.bf16.mxu0 0
      %454 = vmatpush1.bf16.msra.mxu0 0
      %455 = vmatprep.subr.bf16.mxu0 0
      %456 = vmatpush1.bf16.msra.mxu0 0
      %457 = vmatprep.subr.bf16.mxu0 0
      %458 = vmatpush1.bf16.msra.mxu0 0
      %459 = vmatprep.subr.bf16.mxu0 0
      %460 = vmatpush1.bf16.msra.mxu0 0
      %461 = vmatprep.subr.bf16.mxu0 0
      %462 = vmatpush1.bf16.msra.mxu0 0
      %463 = vmatprep.subr.bf16.mxu0 0
      %464 = vmatpush1.bf16.msra.mxu0 0
      %465 = vmatprep.subr.bf16.mxu0 0
      %466 = vmatpush1.bf16.msra.mxu0 0
      %467 = vmatprep.subr.bf16.mxu0 0
      %468 = vmatpush1.bf16.msra.mxu0 0
      %469 = vmatprep.subr.bf16.mxu0 0
      %470 = vmatpush1.bf16.msra.mxu0 0
      %471 = vmatprep.subr.bf16.mxu0 0
      %472 = vmatpush1.bf16.msra.mxu0 0
      %473 = vmatprep.mubr.bf16.mxu0 0
      %474 = vmatmul.mubr.bf16.gmra.mrb[0].mxu0 %v376
      %v475 = vpop.f32.mrb[0].mxu0
      %v476 = vadd.f32 %v367, %v475
      %v477 = vpop.f32.mrb[0].mxu0
      %v478 = vadd.f32 %v367, %v477
      %v479 = vpop.f32.mrb[0].mxu0
      %v480 = vpop.f32.mrb[0].mxu0
      %481 = vdwg.mxu0
      %v482 = vmax.f32 %v476, 0.0
      %v483 = vmax.f32 %v478, 0.0
      %s484 = scalar_lea.vmem %s354, 16
      %v485 = vld [vmem:[%s484] sm:$0xff]
      %v487 = vunpack.c.l.b16 %v485
      %v488 = vunpack.c.h.b16 %v485
      %v489 = vpack.c.b16 %v487, %v487
      %v490 = vpack.c.b16 %v488, %v488
      %v492 = vsel %vm378, %v489, 0
      %v495 = vsel %vm378, %v490, 0
      %497 = vmatprep.subr.bf16.mxu0 %v495
      %498 = vmatpush1.bf16.msra.mxu0 %v492
      %499 = vmatprep.subr.bf16.mxu0 0
      %500 = vmatpush1.bf16.msra.mxu0 0
      %501 = vmatprep.subr.bf16.mxu0 0
      %502 = vmatpush1.bf16.msra.mxu0 0
      %503 = vmatprep.subr.bf16.mxu0 0
      %504 = vmatpush1.bf16.msra.mxu0 0
      %505 = vmatprep.subr.bf16.mxu0 0
      %506 = vmatpush1.bf16.msra.mxu0 0
      %507 = vmatprep.subr.bf16.mxu0 0
      %508 = vmatpush1.bf16.msra.mxu0 0
      %509 = vmatprep.subr.bf16.mxu0 0
      %510 = vmatpush1.bf16.msra.mxu0 0
      %511 = vmatprep.subr.bf16.mxu0 0
      %512 = vmatpush1.bf16.msra.mxu0 0
      %513 = vmatprep.subr.bf16.mxu0 0
      %514 = vmatpush1.bf16.msra.mxu0 0
      %515 = vmatprep.subr.bf16.mxu0 0
      %516 = vmatpush1.bf16.msra.mxu0 0
      %517 = vmatprep.subr.bf16.mxu0 0
      %518 = vmatpush1.bf16.msra.mxu0 0
      %519 = vmatprep.subr.bf16.mxu0 0
      %520 = vmatpush1.bf16.msra.mxu0 0
      %521 = vmatprep.subr.bf16.mxu0 0
      %522 = vmatpush1.bf16.msra.mxu0 0
      %523 = vmatprep.subr.bf16.mxu0 0
      %524 = vmatpush1.bf16.msra.mxu0 0
      %525 = vmatprep.subr.bf16.mxu0 0
      %526 = vmatpush1.bf16.msra.mxu0 0
      %527 = vmatprep.subr.bf16.mxu0 0
      %528 = vmatpush1.bf16.msra.mxu0 0
      %529 = vmatprep.mubr.bf16.mxu0 0
      %530 = vmatmul.mubr.bf16.gmra.mrb[0].mxu0 %v376
      %v531 = vpop.f32.mrb[0].mxu0
      %v532 = vadd.f32 %v367, %v531
      %v533 = vpop.f32.mrb[0].mxu0
      %v534 = vadd.f32 %v367, %v533
      %v535 = vpop.f32.mrb[0].mxu0
      %v536 = vpop.f32.mrb[0].mxu0
      %537 = vdwg.mxu0
      %v538 = vmax.f32 %v532, 0.0
      %v539 = vmax.f32 %v534, 0.0
      %s540 = scalar_lea.vmem %s354, 24
      %v541 = vld [vmem:[%s540] sm:$0xff]
      %v543 = vunpack.c.l.b16 %v541
      %v544 = vunpack.c.h.b16 %v541
      %v545 = vpack.c.b16 %v543, %v543
      %v546 = vpack.c.b16 %v544, %v544
      %v548 = vsel %vm378, %v545, 0
      %v551 = vsel %vm378, %v546, 0
      %553 = vmatprep.subr.bf16.mxu0 %v551
      %554 = vmatpush1.bf16.msra.mxu0 %v548
      %555 = vmatprep.subr.bf16.mxu0 0
      %556 = vmatpush1.bf16.msra.mxu0 0
      %557 = vmatprep.subr.bf16.mxu0 0
      %558 = vmatpush1.bf16.msra.mxu0 0
      %559 = vmatprep.subr.bf16.mxu0 0
      %560 = vmatpush1.bf16.msra.mxu0 0
      %561 = vmatprep.subr.bf16.mxu0 0
      %562 = vmatpush1.bf16.msra.mxu0 0
      %563 = vmatprep.subr.bf16.mxu0 0
      %564 = vmatpush1.bf16.msra.mxu0 0
      %565 = vmatprep.subr.bf16.mxu0 0
      %566 = vmatpush1.bf16.msra.mxu0 0
      %567 = vmatprep.subr.bf16.mxu0 0
      %568 = vmatpush1.bf16.msra.mxu0 0
      %569 = vmatprep.subr.bf16.mxu0 0
      %570 = vmatpush1.bf16.msra.mxu0 0
      %571 = vmatprep.subr.bf16.mxu0 0
      %572 = vmatpush1.bf16.msra.mxu0 0
      %573 = vmatprep.subr.bf16.mxu0 0
      %574 = vmatpush1.bf16.msra.mxu0 0
      %575 = vmatprep.subr.bf16.mxu0 0
      %576 = vmatpush1.bf16.msra.mxu0 0
      %577 = vmatprep.subr.bf16.mxu0 0
      %578 = vmatpush1.bf16.msra.mxu0 0
      %579 = vmatprep.subr.bf16.mxu0 0
      %580 = vmatpush1.bf16.msra.mxu0 0
      %581 = vmatprep.subr.bf16.mxu0 0
      %582 = vmatpush1.bf16.msra.mxu0 0
      %583 = vmatprep.subr.bf16.mxu0 0
      %584 = vmatpush1.bf16.msra.mxu0 0
      %585 = vmatprep.mubr.bf16.mxu0 0
      %586 = vmatmul.mubr.bf16.gmra.mrb[0].mxu0 %v376
      %v587 = vpop.f32.mrb[0].mxu0
      %v588 = vadd.f32 %v367, %v587
      %v589 = vpop.f32.mrb[0].mxu0
      %v590 = vadd.f32 %v367, %v589
      %v591 = vpop.f32.mrb[0].mxu0
      %v592 = vpop.f32.mrb[0].mxu0
      %593 = vdwg.mxu0
      %v594 = vmax.f32 %v588, 0.0
      %v595 = vmax.f32 %v590, 0.0
      %596 = vrot.lane.b32.xlu0 %v594, 17
      %v597 = vpop.permute.xlu0 %596
      %598 = vrot.lane.b32.xlu0 %v595, 17
      %v599 = vpop.permute.xlu0 %598
      %v600 = vlaneseq
      %v601 = vand.u32 %v600, 127
      %vm602 = vcmp.lt.s32.totalorder %v601, 17
      %v603 = vsel %vm602, %v597, %v599
      %v604 = vsel %vm602, %v599, %v597
      %v605 = vld [vmem:[%s1] ss:$8 sm:$0x3]
      %v607 = vlaneseq
      %v608 = vshrl.u32 %v607, 7
      %v609 = vsub.s32 0, %v608
      %v610 = vrot.slane %v605, %v609
      %v611 = vlaneseq
      %v612 = vshrl.u32 %v611, 7
      %v613 = vsub.s32 1, %v612
      %v614 = vrot.slane %v605, %v613
      %v617 = vmul.f32 %v604, %v610
      %v618 = vmul.f32 %v603, %v614
      %v619 = vld [vmem:[%s3] sm:$0xf]
      %v620 = vpack.c.bf16 %v617, %v617
      %v621 = vpack.c.bf16 %v618, %v618
      %622 = vrot.lane.b32.xlu0 %v538, 16
      %v623 = vpop.permute.xlu0 %622
      %624 = vrot.lane.b32.xlu0 %v539, 16
      %v625 = vpop.permute.xlu0 %624
      %vm626 = vcmp.lt.s32.totalorder %v601, 16
      %v627 = vsel %vm626, %v623, %v625
      %v628 = vsel %vm626, %v625, %v623
      %s629 = scalar_lea.vmem %s1, 1
      %v630 = vld [vmem:[%s629] ss:$8 sm:$0x3]
      %v632 = vlaneseq
      %v633 = vshrl.u32 %v632, 7
      %v634 = vsub.s32 0, %v633
      %v635 = vrot.slane %v630, %v634
      %v636 = vlaneseq
      %v637 = vshrl.u32 %v636, 7
      %v638 = vsub.s32 1, %v637
      %v639 = vrot.slane %v630, %v638
      %v642 = vmul.f32 %v628, %v635
      %v643 = vmul.f32 %v627, %v639
      %s644 = scalar_lea.vmem %s3, 4
      %v645 = vld [vmem:[%s644] sm:$0xf]
      %v646 = vpack.c.bf16 %v642, %v642
      %v647 = vpack.c.bf16 %v643, %v643
      %v649 = vsel %vm374, %v645, 0
      %v652 = vsel %vm378, %v646, 0
      %v655 = vsel %vm378, %v647, 0
      %657 = vmatprep.subr.bf16.mxu0 %v655
      %658 = vmatpush1.bf16.msra.mxu0 %v652
      %659 = vmatprep.subr.bf16.mxu0 0
      %660 = vmatpush1.bf16.msra.mxu0 0
      %661 = vmatprep.subr.bf16.mxu0 0
      %662 = vmatpush1.bf16.msra.mxu0 0
      %663 = vmatprep.subr.bf16.mxu0 0
      %664 = vmatpush1.bf16.msra.mxu0 0
      %665 = vmatprep.subr.bf16.mxu0 0
      %666 = vmatpush1.bf16.msra.mxu0 0
      %667 = vmatprep.subr.bf16.mxu0 0
      %668 = vmatpush1.bf16.msra.mxu0 0
      %669 = vmatprep.subr.bf16.mxu0 0
      %670 = vmatpush1.bf16.msra.mxu0 0
      %671 = vmatprep.subr.bf16.mxu0 0
      %672 = vmatpush1.bf16.msra.mxu0 0
      %673 = vmatprep.subr.bf16.mxu0 0
      %674 = vmatpush1.bf16.msra.mxu0 0
      %675 = vmatprep.subr.bf16.mxu0 0
      %676 = vmatpush1.bf16.msra.mxu0 0
      %677 = vmatprep.subr.bf16.mxu0 0
      %678 = vmatpush1.bf16.msra.mxu0 0
      %679 = vmatprep.subr.bf16.mxu0 0
      %680 = vmatpush1.bf16.msra.mxu0 0
      %681 = vmatprep.subr.bf16.mxu0 0
      %682 = vmatpush1.bf16.msra.mxu0 0
      %683 = vmatprep.subr.bf16.mxu0 0
      %684 = vmatpush1.bf16.msra.mxu0 0
      %685 = vmatprep.subr.bf16.mxu0 0
      %686 = vmatpush1.bf16.msra.mxu0 0
      %687 = vmatprep.subr.bf16.mxu0 0
      %688 = vmatpush1.bf16.msra.mxu0 0
      %689 = vmatprep.mubr.bf16.mxu0 0
      %690 = vmatmul.mubr.bf16.gmra.mrb[0].mxu0 %v649
      %v691 = vpop.f32.mrb[0].mxu0
      %v692 = vadd.f32 0.0, %v691
      %v693 = vpop.f32.mrb[0].mxu0
      %v694 = vadd.f32 0.0, %v693
      %v695 = vpop.f32.mrb[0].mxu0
      %v696 = vpop.f32.mrb[0].mxu0
      %697 = vdwg.mxu0
      %v699 = vsel %vm374, %v619, 0
      %v702 = vsel %vm378, %v620, 0
      %v705 = vsel %vm378, %v621, 0
      %707 = vmatprep.subr.bf16.mxu0 %v705
      %708 = vmatpush1.bf16.msra.mxu0 %v702
      %709 = vmatprep.subr.bf16.mxu0 0
      %710 = vmatpush1.bf16.msra.mxu0 0
      %711 = vmatprep.subr.bf16.mxu0 0
      %712 = vmatpush1.bf16.msra.mxu0 0
      %713 = vmatprep.subr.bf16.mxu0 0
      %714 = vmatpush1.bf16.msra.mxu0 0
      %715 = vmatprep.subr.bf16.mxu0 0
      %716 = vmatpush1.bf16.msra.mxu0 0
      %717 = vmatprep.subr.bf16.mxu0 0
      %718 = vmatpush1.bf16.msra.mxu0 0
      %719 = vmatprep.subr.bf16.mxu0 0
      %720 = vmatpush1.bf16.msra.mxu0 0
      %721 = vmatprep.subr.bf16.mxu0 0
      %722 = vmatpush1.bf16.msra.mxu0 0
      %723 = vmatprep.subr.bf16.mxu0 0
      %724 = vmatpush1.bf16.msra.mxu0 0
      %725 = vmatprep.subr.bf16.mxu0 0
      %726 = vmatpush1.bf16.msra.mxu0 0
      %727 = vmatprep.subr.bf16.mxu0 0
      %728 = vmatpush1.bf16.msra.mxu0 0
      %729 = vmatprep.subr.bf16.mxu0 0
      %730 = vmatpush1.bf16.msra.mxu0 0
      %731 = vmatprep.subr.bf16.mxu0 0
      %732 = vmatpush1.bf16.msra.mxu0 0
      %733 = vmatprep.subr.bf16.mxu0 0
      %734 = vmatpush1.bf16.msra.mxu0 0
      %735 = vmatprep.subr.bf16.mxu0 0
      %736 = vmatpush1.bf16.msra.mxu0 0
      %737 = vmatprep.subr.bf16.mxu0 0
      %738 = vmatpush1.bf16.msra.mxu0 0
      %739 = vmatprep.mubr.bf16.mxu0 0
      %740 = vmatmul.mubr.bf16.gmra.mrb[0].mxu0 %v699
      %v741 = vpop.f32.mrb[0].mxu0
      %v742 = vadd.f32 %v692, %v741
      %v743 = vpop.f32.mrb[0].mxu0
      %v744 = vadd.f32 %v694, %v743
      %v745 = vpop.f32.mrb[0].mxu0
      %v746 = vpop.f32.mrb[0].mxu0
      %747 = vdwg.mxu0
      %748 = vrot.lane.b32.xlu0 %v594, 16
      %v749 = vpop.permute.xlu0 %748
      %750 = vrot.lane.b32.xlu0 %v595, 16
      %v751 = vpop.permute.xlu0 %750
      %v752 = vsel %vm626, %v749, %v751
      %v753 = vsel %vm626, %v751, %v749
      %s754 = scalar_lea.vmem %s1, 2
      %v755 = vld [vmem:[%s754] ss:$8 sm:$0x3]
      %v757 = vlaneseq
      %v758 = vshrl.u32 %v757, 7
      %v759 = vsub.s32 0, %v758
      %v760 = vrot.slane %v755, %v759
      %v761 = vlaneseq
      %v762 = vshrl.u32 %v761, 7
      %v763 = vsub.s32 1, %v762
      %v764 = vrot.slane %v755, %v763
      %v767 = vmul.f32 %v753, %v760
      %v768 = vmul.f32 %v752, %v764
      %s769 = scalar_lea.vmem %s3, 8
      %v770 = vld [vmem:[%s769] sm:$0xf]
      %v771 = vpack.c.bf16 %v767, %v767
      %v772 = vpack.c.bf16 %v768, %v768
      %v774 = vsel %vm374, %v770, 0
      %v777 = vsel %vm378, %v771, 0
      %v780 = vsel %vm378, %v772, 0
      %782 = vmatprep.subr.bf16.mxu0 %v780
      %783 = vmatpush1.bf16.msra.mxu0 %v777
      %784 = vmatprep.subr.bf16.mxu0 0
      %785 = vmatpush1.bf16.msra.mxu0 0
      %786 = vmatprep.subr.bf16.mxu0 0
      %787 = vmatpush1.bf16.msra.mxu0 0
      %788 = vmatprep.subr.bf16.mxu0 0
      %789 = vmatpush1.bf16.msra.mxu0 0
      %790 = vmatprep.subr.bf16.mxu0 0
      %791 = vmatpush1.bf16.msra.mxu0 0
      %792 = vmatprep.subr.bf16.mxu0 0
      %793 = vmatpush1.bf16.msra.mxu0 0
      %794 = vmatprep.subr.bf16.mxu0 0
      %795 = vmatpush1.bf16.msra.mxu0 0
      %796 = vmatprep.subr.bf16.mxu0 0
      %797 = vmatpush1.bf16.msra.mxu0 0
      %798 = vmatprep.subr.bf16.mxu0 0
      %799 = vmatpush1.bf16.msra.mxu0 0
      %800 = vmatprep.subr.bf16.mxu0 0
      %801 = vmatpush1.bf16.msra.mxu0 0
      %802 = vmatprep.subr.bf16.mxu0 0
      %803 = vmatpush1.bf16.msra.mxu0 0
      %804 = vmatprep.subr.bf16.mxu0 0
      %805 = vmatpush1.bf16.msra.mxu0 0
      %806 = vmatprep.subr.bf16.mxu0 0
      %807 = vmatpush1.bf16.msra.mxu0 0
      %808 = vmatprep.subr.bf16.mxu0 0
      %809 = vmatpush1.bf16.msra.mxu0 0
      %810 = vmatprep.subr.bf16.mxu0 0
      %811 = vmatpush1.bf16.msra.mxu0 0
      %812 = vmatprep.subr.bf16.mxu0 0
      %813 = vmatpush1.bf16.msra.mxu0 0
      %814 = vmatprep.mubr.bf16.mxu0 0
      %815 = vmatmul.mubr.bf16.gmra.mrb[0].mxu0 %v774
      %v816 = vpop.f32.mrb[0].mxu0
      %v817 = vadd.f32 0.0, %v816
      %v818 = vpop.f32.mrb[0].mxu0
      %v819 = vadd.f32 0.0, %v818
      %v820 = vpop.f32.mrb[0].mxu0
      %v821 = vpop.f32.mrb[0].mxu0
      %822 = vdwg.mxu0
      %v823 = vadd.f32 %v742, %v817
      %v824 = vadd.f32 %v744, %v819
      %825 = vrot.lane.b32.xlu0 %v482, 1
      %v826 = vpop.permute.xlu0 %825
      %827 = vrot.lane.b32.xlu0 %v483, 1
      %v828 = vpop.permute.xlu0 %827
      %vm829 = vcmp.lt.s32.totalorder %v601, 1
      %v830 = vsel %vm829, %v826, %v828
      %v831 = vsel %vm829, %v828, %v826
      %s832 = scalar_lea.vmem %s1, 3
      %v833 = vld [vmem:[%s832] ss:$8 sm:$0x3]
      %v835 = vlaneseq
      %v836 = vshrl.u32 %v835, 7
      %v837 = vsub.s32 0, %v836
      %v838 = vrot.slane %v833, %v837
      %v839 = vlaneseq
      %v840 = vshrl.u32 %v839, 7
      %v841 = vsub.s32 1, %v840
      %v842 = vrot.slane %v833, %v841
      %v845 = vmul.f32 %v831, %v838
      %v846 = vmul.f32 %v830, %v842
      %s847 = scalar_lea.vmem %s3, 12
      %v848 = vld [vmem:[%s847] sm:$0xf]
      %v849 = vpack.c.bf16 %v845, %v845
      %v850 = vpack.c.bf16 %v846, %v846
      %v852 = vsel %vm374, %v848, 0
      %v855 = vsel %vm378, %v849, 0
      %v858 = vsel %vm378, %v850, 0
      %860 = vmatprep.subr.bf16.mxu0 %v858
      %861 = vmatpush1.bf16.msra.mxu0 %v855
      %862 = vmatprep.subr.bf16.mxu0 0
      %863 = vmatpush1.bf16.msra.mxu0 0
      %864 = vmatprep.subr.bf16.mxu0 0
      %865 = vmatpush1.bf16.msra.mxu0 0
      %866 = vmatprep.subr.bf16.mxu0 0
      %867 = vmatpush1.bf16.msra.mxu0 0
      %868 = vmatprep.subr.bf16.mxu0 0
      %869 = vmatpush1.bf16.msra.mxu0 0
      %870 = vmatprep.subr.bf16.mxu0 0
      %871 = vmatpush1.bf16.msra.mxu0 0
      %872 = vmatprep.subr.bf16.mxu0 0
      %873 = vmatpush1.bf16.msra.mxu0 0
      %874 = vmatprep.subr.bf16.mxu0 0
      %875 = vmatpush1.bf16.msra.mxu0 0
      %876 = vmatprep.subr.bf16.mxu0 0
      %877 = vmatpush1.bf16.msra.mxu0 0
      %878 = vmatprep.subr.bf16.mxu0 0
      %879 = vmatpush1.bf16.msra.mxu0 0
      %880 = vmatprep.subr.bf16.mxu0 0
      %881 = vmatpush1.bf16.msra.mxu0 0
      %882 = vmatprep.subr.bf16.mxu0 0
      %883 = vmatpush1.bf16.msra.mxu0 0
      %884 = vmatprep.subr.bf16.mxu0 0
      %885 = vmatpush1.bf16.msra.mxu0 0
      %886 = vmatprep.subr.bf16.mxu0 0
      %887 = vmatpush1.bf16.msra.mxu0 0
      %888 = vmatprep.subr.bf16.mxu0 0
      %889 = vmatpush1.bf16.msra.mxu0 0
      %890 = vmatprep.subr.bf16.mxu0 0
      %891 = vmatpush1.bf16.msra.mxu0 0
      %892 = vmatprep.mubr.bf16.mxu0 0
      %893 = vmatmul.mubr.bf16.gmra.mrb[0].mxu0 %v852
      %v894 = vpop.f32.mrb[0].mxu0
      %v895 = vadd.f32 0.0, %v894
      %v896 = vpop.f32.mrb[0].mxu0
      %v897 = vadd.f32 0.0, %v896
      %v898 = vpop.f32.mrb[0].mxu0
      %v899 = vpop.f32.mrb[0].mxu0
      %900 = vdwg.mxu0
      %v901 = vadd.f32 %v823, %v895
      %v902 = vadd.f32 %v824, %v897
      %s903 = scalar_lea.vmem %s3, 16
      %v904 = vld [vmem:[%s903] sm:$0xf]
      %v905 = vpack.c.bf16 %v426, %v426
      %v906 = vpack.c.bf16 %v427, %v427
      %v908 = vsel %vm374, %v904, 0
      %v911 = vsel %vm378, %v905, 0
      %v914 = vsel %vm378, %v906, 0
      %916 = vmatprep.subr.bf16.mxu0 %v914
      %917 = vmatpush1.bf16.msra.mxu0 %v911
      %918 = vmatprep.subr.bf16.mxu0 0
      %919 = vmatpush1.bf16.msra.mxu0 0
      %920 = vmatprep.subr.bf16.mxu0 0
      %921 = vmatpush1.bf16.msra.mxu0 0
      %922 = vmatprep.subr.bf16.mxu0 0
      %923 = vmatpush1.bf16.msra.mxu0 0
      %924 = vmatprep.subr.bf16.mxu0 0
      %925 = vmatpush1.bf16.msra.mxu0 0
      %926 = vmatprep.subr.bf16.mxu0 0
      %927 = vmatpush1.bf16.msra.mxu0 0
      %928 = vmatprep.subr.bf16.mxu0 0
      %929 = vmatpush1.bf16.msra.mxu0 0
      %930 = vmatprep.subr.bf16.mxu0 0
      %931 = vmatpush1.bf16.msra.mxu0 0
      %932 = vmatprep.subr.bf16.mxu0 0
      %933 = vmatpush1.bf16.msra.mxu0 0
      %934 = vmatprep.subr.bf16.mxu0 0
      %935 = vmatpush1.bf16.msra.mxu0 0
      %936 = vmatprep.subr.bf16.mxu0 0
      %937 = vmatpush1.bf16.msra.mxu0 0
      %938 = vmatprep.subr.bf16.mxu0 0
      %939 = vmatpush1.bf16.msra.mxu0 0
      %940 = vmatprep.subr.bf16.mxu0 0
      %941 = vmatpush1.bf16.msra.mxu0 0
      %942 = vmatprep.subr.bf16.mxu0 0
      %943 = vmatpush1.bf16.msra.mxu0 0
      %944 = vmatprep.subr.bf16.mxu0 0
      %945 = vmatpush1.bf16.msra.mxu0 0
      %946 = vmatprep.subr.bf16.mxu0 0
      %947 = vmatpush1.bf16.msra.mxu0 0
      %948 = vmatprep.mubr.bf16.mxu0 0
      %949 = vmatmul.mubr.bf16.gmra.mrb[0].mxu0 %v908
      %v950 = vpop.f32.mrb[0].mxu0
      %v951 = vadd.f32 0.0, %v950
      %v952 = vpop.f32.mrb[0].mxu0
      %v953 = vadd.f32 0.0, %v952
      %v954 = vpop.f32.mrb[0].mxu0
      %v955 = vpop.f32.mrb[0].mxu0
      %956 = vdwg.mxu0
      %v957 = vadd.f32 %v901, %v951
      %v958 = vadd.f32 %v902, %v953
      %s959 = scalar_lea.vmem %s3, 20
      %v960 = vld [vmem:[%s959] sm:$0xf]
      %v961 = vpack.c.bf16 %v482, %v482
      %v962 = vpack.c.bf16 %v483, %v483
      %v964 = vsel %vm374, %v960, 0
      %v967 = vsel %vm378, %v961, 0
      %v970 = vsel %vm378, %v962, 0
      %972 = vmatprep.subr.bf16.mxu0 %v970
      %973 = vmatpush1.bf16.msra.mxu0 %v967
      %974 = vmatprep.subr.bf16.mxu0 0
      %975 = vmatpush1.bf16.msra.mxu0 0
      %976 = vmatprep.subr.bf16.mxu0 0
      %977 = vmatpush1.bf16.msra.mxu0 0
      %978 = vmatprep.subr.bf16.mxu0 0
      %979 = vmatpush1.bf16.msra.mxu0 0
      %980 = vmatprep.subr.bf16.mxu0 0
      %981 = vmatpush1.bf16.msra.mxu0 0
      %982 = vmatprep.subr.bf16.mxu0 0
      %983 = vmatpush1.bf16.msra.mxu0 0
      %984 = vmatprep.subr.bf16.mxu0 0
      %985 = vmatpush1.bf16.msra.mxu0 0
      %986 = vmatprep.subr.bf16.mxu0 0
      %987 = vmatpush1.bf16.msra.mxu0 0
      %988 = vmatprep.subr.bf16.mxu0 0
      %989 = vmatpush1.bf16.msra.mxu0 0
      %990 = vmatprep.subr.bf16.mxu0 0
      %991 = vmatpush1.bf16.msra.mxu0 0
      %992 = vmatprep.subr.bf16.mxu0 0
      %993 = vmatpush1.bf16.msra.mxu0 0
      %994 = vmatprep.subr.bf16.mxu0 0
      %995 = vmatpush1.bf16.msra.mxu0 0
      %996 = vmatprep.subr.bf16.mxu0 0
      %997 = vmatpush1.bf16.msra.mxu0 0
      %998 = vmatprep.subr.bf16.mxu0 0
      %999 = vmatpush1.bf16.msra.mxu0 0
      %1000 = vmatprep.subr.bf16.mxu0 0
      %1001 = vmatpush1.bf16.msra.mxu0 0
      %1002 = vmatprep.subr.bf16.mxu0 0
      %1003 = vmatpush1.bf16.msra.mxu0 0
      %1004 = vmatprep.mubr.bf16.mxu0 0
      %1005 = vmatmul.mubr.bf16.gmra.mrb[0].mxu0 %v964
      %v1006 = vpop.f32.mrb[0].mxu0
      %v1007 = vadd.f32 0.0, %v1006
      %v1008 = vpop.f32.mrb[0].mxu0
      %v1009 = vadd.f32 0.0, %v1008
      %v1010 = vpop.f32.mrb[0].mxu0
      %v1011 = vpop.f32.mrb[0].mxu0
      %1012 = vdwg.mxu0
      %v1013 = vadd.f32 %v957, %v1007
      %v1014 = vadd.f32 %v958, %v1009
      %1015 = vrot.lane.b32.xlu0 %v594, 1
      %v1016 = vpop.permute.xlu0 %1015
      %1017 = vrot.lane.b32.xlu0 %v595, 1
      %v1018 = vpop.permute.xlu0 %1017
      %v1019 = vsel %vm829, %v1016, %v1018
      %v1020 = vsel %vm829, %v1018, %v1016
      %s1021 = scalar_lea.vmem %s1, 6
      %v1022 = vld [vmem:[%s1021] ss:$8 sm:$0x3]
      %v1024 = vlaneseq
      %v1025 = vshrl.u32 %v1024, 7
      %v1026 = vsub.s32 0, %v1025
      %v1027 = vrot.slane %v1022, %v1026
      %v1028 = vlaneseq
      %v1029 = vshrl.u32 %v1028, 7
      %v1030 = vsub.s32 1, %v1029
      %v1031 = vrot.slane %v1022, %v1030
      %v1034 = vmul.f32 %v1020, %v1027
      %v1035 = vmul.f32 %v1019, %v1031
      %s1036 = scalar_lea.vmem %s3, 24
      %v1037 = vld [vmem:[%s1036] sm:$0xf]
      %v1038 = vpack.c.bf16 %v1034, %v1034
      %v1039 = vpack.c.bf16 %v1035, %v1035
      %v1041 = vsel %vm374, %v1037, 0
      %v1044 = vsel %vm378, %v1038, 0
      %v1047 = vsel %vm378, %v1039, 0
      %1049 = vmatprep.subr.bf16.mxu0 %v1047
      %1050 = vmatpush1.bf16.msra.mxu0 %v1044
      %1051 = vmatprep.subr.bf16.mxu0 0
      %1052 = vmatpush1.bf16.msra.mxu0 0
      %1053 = vmatprep.subr.bf16.mxu0 0
      %1054 = vmatpush1.bf16.msra.mxu0 0
      %1055 = vmatprep.subr.bf16.mxu0 0
      %1056 = vmatpush1.bf16.msra.mxu0 0
      %1057 = vmatprep.subr.bf16.mxu0 0
      %1058 = vmatpush1.bf16.msra.mxu0 0
      %1059 = vmatprep.subr.bf16.mxu0 0
      %1060 = vmatpush1.bf16.msra.mxu0 0
      %1061 = vmatprep.subr.bf16.mxu0 0
      %1062 = vmatpush1.bf16.msra.mxu0 0
      %1063 = vmatprep.subr.bf16.mxu0 0
      %1064 = vmatpush1.bf16.msra.mxu0 0
      %1065 = vmatprep.subr.bf16.mxu0 0
      %1066 = vmatpush1.bf16.msra.mxu0 0
      %1067 = vmatprep.subr.bf16.mxu0 0
      %1068 = vmatpush1.bf16.msra.mxu0 0
      %1069 = vmatprep.subr.bf16.mxu0 0
      %1070 = vmatpush1.bf16.msra.mxu0 0
      %1071 = vmatprep.subr.bf16.mxu0 0
      %1072 = vmatpush1.bf16.msra.mxu0 0
      %1073 = vmatprep.subr.bf16.mxu0 0
      %1074 = vmatpush1.bf16.msra.mxu0 0
      %1075 = vmatprep.subr.bf16.mxu0 0
      %1076 = vmatpush1.bf16.msra.mxu0 0
      %1077 = vmatprep.subr.bf16.mxu0 0
      %1078 = vmatpush1.bf16.msra.mxu0 0
      %1079 = vmatprep.subr.bf16.mxu0 0
      %1080 = vmatpush1.bf16.msra.mxu0 0
      %1081 = vmatprep.mubr.bf16.mxu0 0
      %1082 = vmatmul.mubr.bf16.gmra.mrb[0].mxu0 %v1041
      %v1083 = vpop.f32.mrb[0].mxu0
      %v1084 = vadd.f32 0.0, %v1083
      %v1085 = vpop.f32.mrb[0].mxu0
      %v1086 = vadd.f32 0.0, %v1085
      %v1087 = vpop.f32.mrb[0].mxu0
      %v1088 = vpop.f32.mrb[0].mxu0
      %1089 = vdwg.mxu0
      %v1090 = vadd.f32 %v1013, %v1084
      %v1091 = vadd.f32 %v1014, %v1086
      %s1092 = scalar_lea.vmem %s3, 28
      %v1093 = vld [vmem:[%s1092] sm:$0xf]
      %v1094 = vpack.c.bf16 %v538, %v538
      %v1095 = vpack.c.bf16 %v539, %v539
      %v1097 = vsel %vm374, %v1093, 0
      %v1100 = vsel %vm378, %v1094, 0
      %v1103 = vsel %vm378, %v1095, 0
      %1105 = vmatprep.subr.bf16.mxu0 %v1103
      %1106 = vmatpush1.bf16.msra.mxu0 %v1100
      %1107 = vmatprep.subr.bf16.mxu0 0
      %1108 = vmatpush1.bf16.msra.mxu0 0
      %1109 = vmatprep.subr.bf16.mxu0 0
      %1110 = vmatpush1.bf16.msra.mxu0 0
      %1111 = vmatprep.subr.bf16.mxu0 0
      %1112 = vmatpush1.bf16.msra.mxu0 0
      %1113 = vmatprep.subr.bf16.mxu0 0
      %1114 = vmatpush1.bf16.msra.mxu0 0
      %1115 = vmatprep.subr.bf16.mxu0 0
      %1116 = vmatpush1.bf16.msra.mxu0 0
      %1117 = vmatprep.subr.bf16.mxu0 0
      %1118 = vmatpush1.bf16.msra.mxu0 0
      %1119 = vmatprep.subr.bf16.mxu0 0
      %1120 = vmatpush1.bf16.msra.mxu0 0
      %1121 = vmatprep.subr.bf16.mxu0 0
      %1122 = vmatpush1.bf16.msra.mxu0 0
      %1123 = vmatprep.subr.bf16.mxu0 0
      %1124 = vmatpush1.bf16.msra.mxu0 0
      %1125 = vmatprep.subr.bf16.mxu0 0
      %1126 = vmatpush1.bf16.msra.mxu0 0
      %1127 = vmatprep.subr.bf16.mxu0 0
      %1128 = vmatpush1.bf16.msra.mxu0 0
      %1129 = vmatprep.subr.bf16.mxu0 0
      %1130 = vmatpush1.bf16.msra.mxu0 0
      %1131 = vmatprep.subr.bf16.mxu0 0
      %1132 = vmatpush1.bf16.msra.mxu0 0
      %1133 = vmatprep.subr.bf16.mxu0 0
      %1134 = vmatpush1.bf16.msra.mxu0 0
      %1135 = vmatprep.subr.bf16.mxu0 0
      %1136 = vmatpush1.bf16.msra.mxu0 0
      %1137 = vmatprep.mubr.bf16.mxu0 0
      %1138 = vmatmul.mubr.bf16.gmra.mrb[0].mxu0 %v1097
      %v1139 = vpop.f32.mrb[0].mxu0
      %v1140 = vadd.f32 0.0, %v1139
      %v1141 = vpop.f32.mrb[0].mxu0
      %v1142 = vadd.f32 0.0, %v1141
      %v1143 = vpop.f32.mrb[0].mxu0
      %v1144 = vpop.f32.mrb[0].mxu0
      %1145 = vdwg.mxu0
      %v1146 = vadd.f32 %v1090, %v1140
      %v1147 = vadd.f32 %v1091, %v1142
      %s1148 = scalar_lea.vmem %s3, 32
      %v1149 = vld [vmem:[%s1148] sm:$0xf]
      %v1150 = vpack.c.bf16 %v594, %v594
      %v1151 = vpack.c.bf16 %v595, %v595
      %v1153 = vsel %vm374, %v1149, 0
      %v1156 = vsel %vm378, %v1150, 0
      %v1159 = vsel %vm378, %v1151, 0
      %1161 = vmatprep.subr.bf16.mxu0 %v1159
      %1162 = vmatpush1.bf16.msra.mxu0 %v1156
      %1163 = vmatprep.subr.bf16.mxu0 0
      %1164 = vmatpush1.bf16.msra.mxu0 0
      %1165 = vmatprep.subr.bf16.mxu0 0
      %1166 = vmatpush1.bf16.msra.mxu0 0
      %1167 = vmatprep.subr.bf16.mxu0 0
      %1168 = vmatpush1.bf16.msra.mxu0 0
      %1169 = vmatprep.subr.bf16.mxu0 0
      %1170 = vmatpush1.bf16.msra.mxu0 0
      %1171 = vmatprep.subr.bf16.mxu0 0
      %1172 = vmatpush1.bf16.msra.mxu0 0
      %1173 = vmatprep.subr.bf16.mxu0 0
      %1174 = vmatpush1.bf16.msra.mxu0 0
      %1175 = vmatprep.subr.bf16.mxu0 0
      %1176 = vmatpush1.bf16.msra.mxu0 0
      %1177 = vmatprep.subr.bf16.mxu0 0
      %1178 = vmatpush1.bf16.msra.mxu0 0
      %1179 = vmatprep.subr.bf16.mxu0 0
      %1180 = vmatpush1.bf16.msra.mxu0 0
      %1181 = vmatprep.subr.bf16.mxu0 0
      %1182 = vmatpush1.bf16.msra.mxu0 0
      %1183 = vmatprep.subr.bf16.mxu0 0
      %1184 = vmatpush1.bf16.msra.mxu0 0
      %1185 = vmatprep.subr.bf16.mxu0 0
      %1186 = vmatpush1.bf16.msra.mxu0 0
      %1187 = vmatprep.subr.bf16.mxu0 0
      %1188 = vmatpush1.bf16.msra.mxu0 0
      %1189 = vmatprep.subr.bf16.mxu0 0
      %1190 = vmatpush1.bf16.msra.mxu0 0
      %1191 = vmatprep.subr.bf16.mxu0 0
      %1192 = vmatpush1.bf16.msra.mxu0 0
      %1193 = vmatprep.mubr.bf16.mxu0 0
      %1194 = vmatmul.mubr.bf16.gmra.mrb[0].mxu0 %v1153
      %v1195 = vpop.f32.mrb[0].mxu0
      %v1196 = vadd.f32 0.0, %v1195
      %v1197 = vpop.f32.mrb[0].mxu0
      %v1198 = vadd.f32 0.0, %v1197
      %v1199 = vpop.f32.mrb[0].mxu0
      %v1200 = vpop.f32.mrb[0].mxu0
      %1201 = vdwg.mxu0
      %v1202 = vadd.f32 %v1146, %v1196
      %v1203 = vadd.f32 %v1147, %v1198
      %v1204 = vld [vmem:[%s7] sm:$0xff]
      %1206 = vset.pattern.permute.xlu0 0
      %1207 = vperm.xlu0 %1206, %v1204
      %v1208 = vpop.permute.xlu0 %1207
      %v1210 = vadd.f32 %v1202, %v1208
      %v1211 = vadd.f32 %v1203, %v1208
      %v1212 = vmax.f32 %v1210, 0.0
      %v1213 = vmax.f32 %v1211, 0.0
      %v1214 = vld [vmem:[%s5] sm:$0xf]
      %v1215 = vld [vmem:[%s5 + $0x4] sm:$0xf]
      %v1216 = vld [vmem:[%s5 + $0x8] sm:$0xf]
      %v1217 = vld [vmem:[%s5 + $0xc] sm:$0xf]
      %v1218 = vld [vmem:[%s9] sm:$0xff]
      %v1219 = vld [vmem:[%s9 + $0x8] sm:$0xff]
      %v1220 = vld [vmem:[%s9 + $0x10] sm:$0xff]
      %v1221 = vld [vmem:[%s9 + $0x18] sm:$0xff]
      %1223 = vset.pattern.permute.xlu0 0
      %1224 = vperm.xlu0 %1223, %v1218
      %v1225 = vpop.permute.xlu0 %1224
      %1228 = vset.pattern.permute.xlu0 0
      %1229 = vperm.xlu0 %1228, %v1219
      %v1230 = vpop.permute.xlu0 %1229
      %1233 = vset.pattern.permute.xlu0 0
      %1234 = vperm.xlu0 %1233, %v1220
      %v1235 = vpop.permute.xlu0 %1234
      %1238 = vset.pattern.permute.xlu0 0
      %1239 = vperm.xlu0 %1238, %v1221
      %v1240 = vpop.permute.xlu0 %1239
      %v1246 = vunpack.c.l.b16 %v1214
      %v1247 = vunpack.c.l.b16 %v1215
      %v1248 = vunpack.c.l.b16 %v1216
      %v1249 = vunpack.c.l.b16 %v1217
      %v1250 = vpack.c.b16 %v1247, %v1246
      %v1251 = vpack.c.b16 %v1249, %v1248
      %v1253 = vsel %vm374, %v1250, 0
      %v1256 = vsel %vm374, %v1251, 0
      %1258 = vmatprep.subr.bf16.mxu0 %v383
      %1259 = vmatpush1.bf16.msra.mxu0 %v380
      %1260 = vmatprep.subr.bf16.mxu0 0
      %1261 = vmatpush1.bf16.msra.mxu0 0
      %1262 = vmatprep.subr.bf16.mxu0 0
      %1263 = vmatpush1.bf16.msra.mxu0 0
      %1264 = vmatprep.subr.bf16.mxu0 0
      %1265 = vmatpush1.bf16.msra.mxu0 0
      %1266 = vmatprep.subr.bf16.mxu0 0
      %1267 = vmatpush1.bf16.msra.mxu0 0
      %1268 = vmatprep.subr.bf16.mxu0 0
      %1269 = vmatpush1.bf16.msra.mxu0 0
      %1270 = vmatprep.subr.bf16.mxu0 0
      %1271 = vmatpush1.bf16.msra.mxu0 0
      %1272 = vmatprep.subr.bf16.mxu0 0
      %1273 = vmatpush1.bf16.msra.mxu0 0
      %1274 = vmatprep.subr.bf16.mxu0 0
      %1275 = vmatpush1.bf16.msra.mxu0 0
      %1276 = vmatprep.subr.bf16.mxu0 0
      %1277 = vmatpush1.bf16.msra.mxu0 0
      %1278 = vmatprep.subr.bf16.mxu0 0
      %1279 = vmatpush1.bf16.msra.mxu0 0
      %1280 = vmatprep.subr.bf16.mxu0 0
      %1281 = vmatpush1.bf16.msra.mxu0 0
      %1282 = vmatprep.subr.bf16.mxu0 0
      %1283 = vmatpush1.bf16.msra.mxu0 0
      %1284 = vmatprep.subr.bf16.mxu0 0
      %1285 = vmatpush1.bf16.msra.mxu0 0
      %1286 = vmatprep.subr.bf16.mxu0 0
      %1287 = vmatpush1.bf16.msra.mxu0 0
      %1288 = vmatprep.subr.bf16.mxu0 0
      %1289 = vmatpush1.bf16.msra.mxu0 0
      %1290 = vmatprep.mubr.bf16.mxu0 0
      %1291 = vmatmul.mubr.bf16.gmra.mrb[0].mxu0 %v1253
      %v1292 = vpop.f32.mrb[0].mxu0
      %v1293 = vadd.f32 %v1225, %v1292
      %v1294 = vpop.f32.mrb[0].mxu0
      %v1295 = vadd.f32 %v1225, %v1294
      %v1296 = vpop.f32.mrb[0].mxu0
      %v1297 = vadd.f32 %v1230, %v1296
      %v1298 = vpop.f32.mrb[0].mxu0
      %v1299 = vadd.f32 %v1230, %v1298
      %1300 = vmatprep.mubr.bf16.mxu0 0
      %1301 = vmatmul.mubr.bf16.gmra.mrb[0].mxu0 %v1256
      %v1302 = vpop.f32.mrb[0].mxu0
      %v1303 = vadd.f32 %v1235, %v1302
      %v1304 = vpop.f32.mrb[0].mxu0
      %v1305 = vadd.f32 %v1235, %v1304
      %v1306 = vpop.f32.mrb[0].mxu0
      %v1307 = vadd.f32 %v1240, %v1306
      %v1308 = vpop.f32.mrb[0].mxu0
      %v1309 = vadd.f32 %v1240, %v1308
      %1310 = vdwg.mxu0
      %v1311 = vld [vmem:[%s4] sm:$0xf]
      %v1312 = vld [vmem:[%s4 + $0x4] sm:$0xf]
      %v1313 = vld [vmem:[%s4 + $0x8] sm:$0xf]
      %v1314 = vld [vmem:[%s4 + $0xc] sm:$0xf]
      %v1315 = vpack.c.bf16 %v1212, %v1212
      %v1316 = vpack.c.bf16 %v1213, %v1213
      %v1317 = vld [vmem:[%s8] sm:$0xff]
      %v1318 = vld [vmem:[%s8 + $0x8] sm:$0xff]
      %v1319 = vld [vmem:[%s8 + $0x10] sm:$0xff]
      %v1320 = vld [vmem:[%s8 + $0x18] sm:$0xff]
      %1322 = vset.pattern.permute.xlu0 0
      %1323 = vperm.xlu0 %1322, %v1317
      %v1324 = vpop.permute.xlu0 %1323
      %1327 = vset.pattern.permute.xlu0 0
      %1328 = vperm.xlu0 %1327, %v1318
      %v1329 = vpop.permute.xlu0 %1328
      %1332 = vset.pattern.permute.xlu0 0
      %1333 = vperm.xlu0 %1332, %v1319
      %v1334 = vpop.permute.xlu0 %1333
      %1337 = vset.pattern.permute.xlu0 0
      %1338 = vperm.xlu0 %1337, %v1320
      %v1339 = vpop.permute.xlu0 %1338
      %v1345 = vunpack.c.l.b16 %v1311
      %v1346 = vunpack.c.l.b16 %v1312
      %v1347 = vunpack.c.l.b16 %v1313
      %v1348 = vunpack.c.l.b16 %v1314
      %v1349 = vpack.c.b16 %v1346, %v1345
      %v1350 = vpack.c.b16 %v1348, %v1347
      %v1352 = vsel %vm374, %v1349, 0
      %v1355 = vsel %vm374, %v1350, 0
      %v1358 = vsel %vm378, %v1315, 0
      %v1361 = vsel %vm378, %v1316, 0
      %1363 = vmatprep.subr.bf16.mxu0 %v1361
      %1364 = vmatpush1.bf16.msra.mxu0 %v1358
      %1365 = vmatprep.subr.bf16.mxu0 0
      %1366 = vmatpush1.bf16.msra.mxu0 0
      %1367 = vmatprep.subr.bf16.mxu0 0
      %1368 = vmatpush1.bf16.msra.mxu0 0
      %1369 = vmatprep.subr.bf16.mxu0 0
      %1370 = vmatpush1.bf16.msra.mxu0 0
      %1371 = vmatprep.subr.bf16.mxu0 0
      %1372 = vmatpush1.bf16.msra.mxu0 0
      %1373 = vmatprep.subr.bf16.mxu0 0
      %1374 = vmatpush1.bf16.msra.mxu0 0
      %1375 = vmatprep.subr.bf16.mxu0 0
      %1376 = vmatpush1.bf16.msra.mxu0 0
      %1377 = vmatprep.subr.bf16.mxu0 0
      %1378 = vmatpush1.bf16.msra.mxu0 0
      %1379 = vmatprep.subr.bf16.mxu0 0
      %1380 = vmatpush1.bf16.msra.mxu0 0
      %1381 = vmatprep.subr.bf16.mxu0 0
      %1382 = vmatpush1.bf16.msra.mxu0 0
      %1383 = vmatprep.subr.bf16.mxu0 0
      %1384 = vmatpush1.bf16.msra.mxu0 0
      %1385 = vmatprep.subr.bf16.mxu0 0
      %1386 = vmatpush1.bf16.msra.mxu0 0
      %1387 = vmatprep.subr.bf16.mxu0 0
      %1388 = vmatpush1.bf16.msra.mxu0 0
      %1389 = vmatprep.subr.bf16.mxu0 0
      %1390 = vmatpush1.bf16.msra.mxu0 0
      %1391 = vmatprep.subr.bf16.mxu0 0
      %1392 = vmatpush1.bf16.msra.mxu0 0
      %1393 = vmatprep.subr.bf16.mxu0 0
      %1394 = vmatpush1.bf16.msra.mxu0 0
      %1395 = vmatprep.mubr.bf16.mxu0 0
      %1396 = vmatmul.mubr.bf16.gmra.mrb[0].mxu0 %v1352
      %v1397 = vpop.f32.mrb[0].mxu0
      %v1398 = vadd.f32 %v1324, %v1397
      %v1399 = vpop.f32.mrb[0].mxu0
      %v1400 = vadd.f32 %v1324, %v1399
      %v1401 = vpop.f32.mrb[0].mxu0
      %v1402 = vadd.f32 %v1329, %v1401
      %v1403 = vpop.f32.mrb[0].mxu0
      %v1404 = vadd.f32 %v1329, %v1403
      %1405 = vmatprep.mubr.bf16.mxu0 0
      %1406 = vmatmul.mubr.bf16.gmra.mrb[0].mxu0 %v1355
      %v1407 = vpop.f32.mrb[0].mxu0
      %v1408 = vadd.f32 %v1334, %v1407
      %v1409 = vpop.f32.mrb[0].mxu0
      %v1410 = vadd.f32 %v1334, %v1409
      %v1411 = vpop.f32.mrb[0].mxu0
      %v1412 = vadd.f32 %v1339, %v1411
      %v1413 = vpop.f32.mrb[0].mxu0
      %v1414 = vadd.f32 %v1339, %v1413
      %1415 = vdwg.mxu0
      %v1416 = vadd.f32 %v1398, %v1293
      %v1417 = vadd.f32 %v1400, %v1295
      %v1418 = vadd.f32 %v1402, %v1297
      %v1419 = vadd.f32 %v1404, %v1299
      %v1420 = vadd.f32 %v1408, %v1303
      %v1421 = vadd.f32 %v1410, %v1305
      %v1422 = vadd.f32 %v1412, %v1307
      %v1423 = vadd.f32 %v1414, %v1309
      %v1424 = vmax.f32 %v1416, 0.0
      %v1425 = vmax.f32 %v1417, 0.0
      %v1426 = vmax.f32 %v1418, 0.0
      %v1427 = vmax.f32 %v1419, 0.0
      %v1428 = vmax.f32 %v1420, 0.0
      %v1429 = vmax.f32 %v1421, 0.0
      %v1430 = vmax.f32 %v1422, 0.0
      %v1431 = vmax.f32 %v1423, 0.0
      %1432 = vst [vmem:[%s359] sm:$0xff] %v1424
      %1433 = vst [vmem:[%s359 + $0x8] sm:$0xff] %v1425
      %1434 = vst [vmem:[%s359 + $0x10] sm:$0xff] %v1426
      %1435 = vst [vmem:[%s359 + $0x18] sm:$0xff] %v1427
      %1436 = vst [vmem:[%s359 + $0x20] sm:$0xff] %v1428
      %1437 = vst [vmem:[%s359 + $0x28] sm:$0xff] %v1429
      %1438 = vst [vmem:[%s359 + $0x30] sm:$0xff] %v1430
      %1439 = vst [vmem:[%s359 + $0x38] sm:$0xff] %v1431
      %p1440 = scmp.lt.s32.totalorder %s21, 1
      %s1441 = scalar_select %p1440, %s21, 1
      %s1442 = smul.addr %s1441, 8
      %s1443 = smul.addr %s1442, 8
      %s1444 = scalar_lea.vmem %s10, %s1443
      // Predicated region
      $region61: #{bottleneck_forward.1} parent=59 // pred_check
        %p1445 = pneg %p254
      $region62: #{bottleneck_forward.1} parent=59 // pred_check_branch
        %1447 = sbr.rel (%p1445) target = $region64
      $region63: #{bottleneck_forward.1} parent=59 // pred_region
        _
      $region64: #{bottleneck_forward.1} parent=59 // pred_fallthru
        _
    $region60: #{bottleneck_forward.1} parent=5 // pred_fallthru
      _
    %p1448 = scmp.le.s32.totalorder 2, %s16
    // Predicated region
    $region65: #{bottleneck_forward.1} parent=5 // pred_check
      %p1449 = pneg %p1448
    $region66: #{bottleneck_forward.1} parent=5 // pred_check_branch
      %1451 = sbr.rel (%p1449) target = $region68
    $region67: #{bottleneck_forward.1} parent=5 // pred_region
      %s1452 = ssub.s32 %s16, 2
      // Predicated region
      $region69: #{bottleneck_forward.1} parent=67 // pred_check
        %p1453 = pneg %p260
      $region70: #{bottleneck_forward.1} parent=67 // pred_check_branch
        %1455 = sbr.rel (%p1453) target = $region72
      $region71: #{bottleneck_forward.1} parent=67 // pred_region
        %p1456 = scmp.lt.s32.totalorder %s22, 1
        %s1457 = scalar_select %p1456, %s22, 1
        %s1458 = smul.addr %s1457, 8
        %s1459 = smul.addr %s1458, 8
        %s1460 = scalar_lea.vmem %s10, %s1459
      $region72: #{bottleneck_forward.1} parent=67 // pred_fallthru
        _
    $region68: #{bottleneck_forward.1} parent=5 // pred_fallthru
      _
  $region6: #{bottleneck_forward.1} parent=0 // loop_footer
    %s20 = sadd.s32 1, %s16
  $region7: #{bottleneck_forward.1} parent=0 // loop_footer_branch
    %15 = sbr.rel target = $region3
  $region8: #{bottleneck_forward.1} parent=0 // loop_exit
    _

</llo_original>
